<compile_context>
chip_gen: v7x
topology: tpu7x:2x2x1
jax: 0.10.0
libtpu: 0.0.40
codegen_flags: <defaults>
</compile_context>

<pallas_src>
import functools

import jax
import jax.numpy as jnp
import numpy as np
from jax.experimental import pallas as pl
from jax.experimental.pallas import tpu as pltpu

BN_EPS = 1e-3   # nn.BatchNorm2d(..., eps=0.001)
C1 = 8          # conv1 output channels
C2 = 16         # conv2 output channels


# ---------------------------------------------------------------------------
# Single fused kernel
# ---------------------------------------------------------------------------
def _fused_dqn_kernel(cols_ref, wc1_ref, g1_ref, be1_ref,
                      wc2_ref, g2_ref, be2_ref,
                      wfc1_ref, bfc1_ref, wfc2_ref, bfc2_ref,
                      wh_ref, bh_ref,
                      q_ref,
                      feats_ref,
                      *, N, HW, A, mm_dtype):
    f32 = jnp.float32
    inv_p = 1.0 / float(N * HW)

    # ---- conv1 (3x3, pad=1): one MXU matmul on the glue-built im2col slab.
    # cols columns: t = kh*3 + kw for t < 9, exact-zero padding for t >= 9.
    h1 = jnp.dot(cols_ref[...], wc1_ref[...], preferred_element_type=f32)    # (P, 8)

    # ---- BatchNorm2d(8): training-mode batch stats, single-pass variance; ReLU
    mu1 = jnp.sum(h1, axis=0, keepdims=True) * inv_p
    ms1 = jnp.sum(h1 * h1, axis=0, keepdims=True) * inv_p
    h1 = (h1 - mu1) * jax.lax.rsqrt(ms1 - mu1 * mu1 + BN_EPS) * g1_ref[...] + be1_ref[...]
    h1 = jnp.maximum(h1, 0.0)

    # ---- conv2 (1x1) == (P,8)@(8,16); BN(16) + ReLU
    h2 = jnp.dot(h1, wc2_ref[...], preferred_element_type=f32)               # (P, 16)
    mu2 = jnp.sum(h2, axis=0, keepdims=True) * inv_p
    ms2 = jnp.sum(h2 * h2, axis=0, keepdims=True) * inv_p
    h2 = (h2 - mu2) * jax.lax.rsqrt(ms2 - mu2 * mu2 + BN_EPS) * g2_ref[...] + be2_ref[...]
    feats_ref[...] = jnp.maximum(h2, 0.0)                                    # (P, 16)

    # ---- fc1 fused with the flatten: per-pixel (N,16)@(16,128) accumulation.
    # wfc1's K axis was permuted in glue to pixel-major order (q*16 + c), so
    # block q of wfc1 matches the (N, 16) feats block of pixel q directly.
    # No masked-store relayout and no (N, HW*16) scratch are needed.
    z = jnp.zeros((N, 128), f32)
    for q in range(HW):
        fb = feats_ref[pl.ds(q * N, N), :].astype(mm_dtype)                  # (N, 16)
        wb = wfc1_ref[pl.ds(q * C2, C2), :]                                  # (16, 128)
        z = z + jnp.dot(fb, wb, preferred_element_type=f32)
    z = jnp.maximum(z + bfc1_ref[...], 0.0)                                  # (N, 128)

    # ---- fc2 + ReLU
    z2 = jnp.dot(z.astype(mm_dtype), wfc2_ref[...], preferred_element_type=f32)
    z2 = jnp.maximum(z2 + bfc2_ref[...], 0.0)                                # (N, 64)

    # ---- fused dueling head, lane-dense: columns = [adv_0..adv_{A-1} | val | 0..]
    head = jnp.dot(z2.astype(mm_dtype), wh_ref[...], preferred_element_type=f32)
    head = head + bh_ref[...]                                                # (N, 128)
    val = head[:, A:A + 1]                                                   # (N, 1)
    # q = values + (advantages - advantages.mean()); padded head columns are
    # exactly zero (zero weights + zero bias), so they drop out of the sum.
    mean_adv = (jnp.sum(head) - jnp.sum(val)) * (1.0 / float(N * A))
    # Lane-dense (N, 128) store; lanes >= A hold garbage and are sliced off in glue.
    q_ref[...] = head + (val - mean_adv)


def _spec(shape):
    nd = len(shape)
    return pl.BlockSpec(shape, lambda i, _nd=nd: (0,) * _nd)


# ---------------------------------------------------------------------------
# Forward wrapper (glue: im2col + weight prep, all plain XLA)
# ---------------------------------------------------------------------------
def dueling_dqn_forward(x_nchw, params, *, matmul_dtype=jnp.bfloat16):
    p = params
    x = x_nchw.astype(jnp.float32)
    N, Cin, H, W = x.shape
    assert Cin == 1
    HW = H * W
    P = N * HW
    A = p["adv_w"].shape[0]
    assert A + 1 <= 128, "dueling head is padded to 128 lanes; need A <= 127"

    # ---- im2col in glue (lane-dense (P, 16) slab: 9 taps + zero K-pad).
    # Row ordering r = (h*W + w)*N + n (pixel-outer, batch-inner) so the
    # per-pixel feats block feeds the fused flatten+fc1 accumulation directly.
    xp = jnp.pad(x[:, 0], ((0, 0), (1, 1), (1, 1)))                # (N, H+2, W+2)
    taps = [xp[:, kh:kh + H, kw:kw + W] for kh in range(3) for kw in range(3)]
    cols = jnp.stack(taps, axis=-1)                                # (N, H, W, 9)
    cols = jnp.transpose(cols, (1, 2, 0, 3)).reshape(P, 9)
    cols = jnp.pad(cols, ((0, 0), (0, 16 - 9)))                    # (P, 16)

    # ---- weight prep (glue only). Conv biases intentionally dropped:
    # training-mode BN subtracts the batch mean right after each conv.
    wc1 = jnp.pad(p["conv1_w"].reshape(C1, 9).T, ((0, 16 - 9), (0, 0)))   # (16, 8)
    g1, be1 = p["bn1_g"].reshape(1, C1), p["bn1_b"].reshape(1, C1)
    wc2 = p["conv2_w"].reshape(C2, C1).T                                  # (8, 16)
    g2, be2 = p["bn2_g"].reshape(1, C2), p["bn2_b"].reshape(1, C2)

    # fc1: permute K axis from torch-Flatten order (c*HW + q) to pixel-major
    # (q*16 + c); cast to bf16 for the MXU (accumulation stays f32 in-kernel).
    wfc1 = jnp.transpose(p["fc1_w"].reshape(128, C2, HW), (2, 1, 0))
    wfc1 = wfc1.reshape(HW * C2, 128).astype(matmul_dtype)
    bfc1 = p["fc1_b"].reshape(1, -1)
    wfc2 = p["fc2_w"].T.astype(matmul_dtype)                              # (128, 64)
    bfc2 = p["fc2_b"].reshape(1, -1)

    # Fused dueling head padded to a lane-dense 128-wide output:
    #   columns = [adv_0 .. adv_{A-1} | val | zeros]
    wh = jnp.zeros((64, 128), jnp.float32)
    wh = wh.at[:, :A].set(p["adv_w"].T).at[:, A].set(p["val_w"][0])
    wh = wh.astype(matmul_dtype)
    bh = jnp.zeros((1, 128), jnp.float32)
    bh = bh.at[0, :A].set(p["adv_b"]).at[0, A].set(p["val_b"][0])

    args = (cols, wc1, g1, be1, wc2, g2, be2, wfc1, bfc1, wfc2, bfc2, wh, bh)

    # TODO(synk): for production batch sizes, tile the pixel/batch axis with a
    # real grid: BlockSpec-tiled cols/output (weight specs pinned at block (0,0)
    # so they stay VMEM-resident across steps), BN restructured as sum/sumsq
    # accumulators finalized with pl.when (two passes), the batch-tile axis
    # marked dimension_semantics=("parallel", ...) to shard across v7x's two
    # TensorCores, and tile sizes budgeted for v7x's 64 MiB VMEM (about half
    # the v6e tile) via pltpu.CompilerParams(vmem_limit_bytes=...).  At this
    # toy size the call is launch-bound and a single resident block wins.
    out = pl.pallas_call(
        functools.partial(_fused_dqn_kernel, N=N, HW=HW, A=A, mm_dtype=matmul_dtype),
        out_shape=jax.ShapeDtypeStruct((N, 128), jnp.float32),
        grid=(1,),
        in_specs=[_spec(a.shape) for a in args],
        out_specs=_spec((N, 128)),
        scratch_shapes=[pltpu.VMEM((P, C2), jnp.float32)],     # conv features
        compiler_params=pltpu.CompilerParams(dimension_semantics=("arbitrary",)),
    )(*args)
    return out[:, :A]


# ---------------------------------------------------------------------------
# Pure-JAX reference (verification only; includes the conv biases)
# ---------------------------------------------------------------------------
def reference_forward(x, p):
    x = x.astype(jnp.float32)
    N = x.shape[0]

    def bn(h, g, b):
        mu = h.mean(axis=(0, 2, 3), keepdims=True)
        var = ((h - mu) ** 2).mean(axis=(0, 2, 3), keepdims=True)
        return (h - mu) / jnp.sqrt(var + BN_EPS) * g[None, :, None, None] + b[None, :, None, None]

    dn = ("NCHW", "OIHW", "NCHW")
    h = jax.lax.conv_general_dilated(x, p["conv1_w"], (1, 1), ((1, 1), (1, 1)),
                                     dimension_numbers=dn) + p["conv1_b"][None, :, None, None]
    h = jnp.maximum(bn(h, p["bn1_g"], p["bn1_b"]), 0.0)
    h = jax.lax.conv_general_dilated(h, p["conv2_w"], (1, 1), ((0, 0), (0, 0)),
                                     dimension_numbers=dn) + p["conv2_b"][None, :, None, None]
    h = jnp.maximum(bn(h, p["bn2_g"], p["bn2_b"]), 0.0)
    f = h.reshape(N, -1)
    f = jnp.maximum(f @ p["fc1_w"].T + p["fc1_b"], 0.0)
    f = jnp.maximum(f @ p["fc2_w"].T + p["fc2_b"], 0.0)
    v = f @ p["val_w"].T + p["val_b"]
    a = f @ p["adv_w"].T + p["adv_b"]
    return v + (a - a.mean())


# ---------------------------------------------------------------------------
# Deterministic parameter init (synthetic; shapes follow DuelingDQN.__init__)
# ---------------------------------------------------------------------------
def init_params(key, n_actions):
    ks = jax.random.split(key, 16)
    nrm = lambda k, s, sc=0.1: (jax.random.normal(k, s, jnp.float32) * sc)
    return {
        "conv1_w": nrm(ks[0], (8, 1, 3, 3), 0.2),
        "conv1_b": nrm(ks[1], (8,), 0.1),
        "bn1_g": 1.0 + nrm(ks[2], (8,), 0.1),
        "bn1_b": nrm(ks[3], (8,), 0.1),
        "conv2_w": nrm(ks[4], (16, 8, 1, 1), 0.2),
        "conv2_b": nrm(ks[5], (16,), 0.1),
        "bn2_g": 1.0 + nrm(ks[6], (16,), 0.1),
        "bn2_b": nrm(ks[7], (16,), 0.1),
        "fc1_w": nrm(ks[8], (128, 16 * n_actions), 0.05),
        "fc1_b": nrm(ks[9], (128,), 0.05),
        "fc2_w": nrm(ks[10], (64, 128), 0.05),
        "fc2_b": nrm(ks[11], (64,), 0.05),
        "val_w": nrm(ks[12], (1, 64), 0.05),
        "val_b": nrm(ks[13], (1,), 0.05),
        "adv_w": nrm(ks[14], (n_actions, 64), 0.05),
        "adv_b": nrm(ks[15], (n_actions,), 0.05),
    }


if __name__ == "__main__":
    # Linear(16*output, 128) after Flatten of (N,16,H,W) implies H*W == output.
    N, H, W = 2, 4, 4
    n_actions = H * W          # output = 16

    key = jax.random.PRNGKey(0)
    k_x, k_p = jax.random.split(key)
    x = jax.random.normal(k_x, (N, 1, H, W), jnp.float32)   # NCHW, as PyTorch
    params = init_params(k_p, n_actions)

    q_ref = reference_forward(x, params)

    # 1) all-f32 path at tight tolerance: catches layout / permutation bugs.
    q32 = jax.jit(functools.partial(dueling_dqn_forward, matmul_dtype=jnp.float32))(x, params)
    q32 = jax.block_until_ready(q32)
    np.testing.assert_allclose(np.asarray(q32), np.asarray(q_ref), rtol=1e-4, atol=1e-4)

    # 2) default bf16-MXU path (f32 accumulation): looser tolerance.
    qbf = jax.jit(dueling_dqn_forward)(x, params)
    qbf = jax.block_until_ready(qbf)
    np.testing.assert_allclose(np.asarray(qbf), np.asarray(q_ref), rtol=3e-2, atol=3e-2)

    print("KERNEL_OK")
</pallas_src>

<mosaic_0001>
module attributes {stable_mosaic.version = 11 : i64} {
  func.func @_fused_dqn_kernel(%arg0: i32, %arg1: memref<32x16xf32, #tpu.memory_space<vmem>>, %arg2: memref<16x8xf32, #tpu.memory_space<vmem>>, %arg3: memref<1x8xf32, #tpu.memory_space<vmem>>, %arg4: memref<1x8xf32, #tpu.memory_space<vmem>>, %arg5: memref<8x16xf32, #tpu.memory_space<vmem>>, %arg6: memref<1x16xf32, #tpu.memory_space<vmem>>, %arg7: memref<1x16xf32, #tpu.memory_space<vmem>>, %arg8: memref<256x128xf32, #tpu.memory_space<vmem>>, %arg9: memref<1x128xf32, #tpu.memory_space<vmem>>, %arg10: memref<128x64xf32, #tpu.memory_space<vmem>>, %arg11: memref<1x64xf32, #tpu.memory_space<vmem>>, %arg12: memref<64x128xf32, #tpu.memory_space<vmem>>, %arg13: memref<1x128xf32, #tpu.memory_space<vmem>>, %arg14: memref<2x128xf32, #tpu.memory_space<vmem>>, %arg15: memref<32x16xf32, #tpu.memory_space<vmem>>) attributes {dimension_semantics = [#tpu.dimension_semantics<arbitrary>], iteration_bounds = array<i64: 1>, scalar_prefetch = 0 : i64, scratch_operands = 1 : i64, tpu.core_type = #tpu.core_type<tc>, window_params = [{pipeline_mode = #tpu.pipeline_mode<synchronous>, transform_indices = @transform_0, window_bounds = array<i64: 32, 16>}, {pipeline_mode = #tpu.pipeline_mode<synchronous>, transform_indices = @transform_1, window_bounds = array<i64: 16, 8>}, {pipeline_mode = #tpu.pipeline_mode<synchronous>, transform_indices = @transform_2, window_bounds = array<i64: 1, 8>}, {pipeline_mode = #tpu.pipeline_mode<synchronous>, transform_indices = @transform_3, window_bounds = array<i64: 1, 8>}, {pipeline_mode = #tpu.pipeline_mode<synchronous>, transform_indices = @transform_4, window_bounds = array<i64: 8, 16>}, {pipeline_mode = #tpu.pipeline_mode<synchronous>, transform_indices = @transform_5, window_bounds = array<i64: 1, 16>}, {pipeline_mode = #tpu.pipeline_mode<synchronous>, transform_indices = @transform_6, window_bounds = array<i64: 1, 16>}, {pipeline_mode = #tpu.pipeline_mode<synchronous>, transform_indices = @transform_7, window_bounds = array<i64: 256, 128>}, {pipeline_mode = #tpu.pipeline_mode<synchronous>, transform_indices = @transform_8, window_bounds = array<i64: 1, 128>}, {pipeline_mode = #tpu.pipeline_mode<synchronous>, transform_indices = @transform_9, window_bounds = array<i64: 128, 64>}, {pipeline_mode = #tpu.pipeline_mode<synchronous>, transform_indices = @transform_10, window_bounds = array<i64: 1, 64>}, {pipeline_mode = #tpu.pipeline_mode<synchronous>, transform_indices = @transform_11, window_bounds = array<i64: 64, 128>}, {pipeline_mode = #tpu.pipeline_mode<synchronous>, transform_indices = @transform_12, window_bounds = array<i64: 1, 128>}, {pipeline_mode = #tpu.pipeline_mode<synchronous>, transform_indices = @transform_13, window_bounds = array<i64: 2, 128>}]} {
    %c0 = arith.constant 0 : index
    %c0_0 = arith.constant 0 : index
    %0 = vector.load %arg1[%c0, %c0_0] : memref<32x16xf32, #tpu.memory_space<vmem>>, vector<32x16xf32>
    %c0_1 = arith.constant 0 : index
    %c0_2 = arith.constant 0 : index
    %1 = vector.load %arg2[%c0_1, %c0_2] : memref<16x8xf32, #tpu.memory_space<vmem>>, vector<16x8xf32>
    %cst = arith.constant dense<0.000000e+00> : vector<32x8xf32>
    %2 = tpu.matmul %0, %1, %cst {dimension_numbers = #tpu.dot_dimension_numbers<[1], [0], [0], [1], [0, 0, 1, 1], [], []>} : vector<32x16xf32>, vector<16x8xf32>, vector<32x8xf32> -> vector<32x8xf32>
    %cst_3 = arith.constant dense<0.000000e+00> : vector<8xf32>
    %3 = vector.multi_reduction <add>, %2, %cst_3 [0] : vector<32x8xf32> to vector<8xf32>
    %4 = vector.shape_cast %3 : vector<8xf32> to vector<1x8xf32>
    %cst_4 = arith.constant 3.125000e-02 : f32
    %5 = vector.broadcast %cst_4 : f32 to vector<1x8xf32>
    %6 = arith.mulf %4, %5 : vector<1x8xf32>
    %7 = arith.mulf %2, %2 : vector<32x8xf32>
    %cst_5 = arith.constant dense<0.000000e+00> : vector<8xf32>
    %8 = vector.multi_reduction <add>, %7, %cst_5 [0] : vector<32x8xf32> to vector<8xf32>
    %9 = vector.shape_cast %8 : vector<8xf32> to vector<1x8xf32>
    %cst_6 = arith.constant 3.125000e-02 : f32
    %10 = vector.broadcast %cst_6 : f32 to vector<1x8xf32>
    %11 = arith.mulf %9, %10 : vector<1x8xf32>
    %12 = vector.broadcast %6 : vector<1x8xf32> to vector<32x8xf32>
    %13 = arith.subf %2, %12 : vector<32x8xf32>
    %14 = arith.mulf %6, %6 : vector<1x8xf32>
    %15 = arith.subf %11, %14 : vector<1x8xf32>
    %cst_7 = arith.constant 1.000000e-03 : f32
    %16 = vector.broadcast %cst_7 : f32 to vector<1x8xf32>
    %17 = arith.addf %15, %16 : vector<1x8xf32>
    %18 = math.rsqrt %17 : vector<1x8xf32>
    %19 = vector.broadcast %18 : vector<1x8xf32> to vector<32x8xf32>
    %20 = arith.mulf %13, %19 : vector<32x8xf32>
    %c0_8 = arith.constant 0 : index
    %c0_9 = arith.constant 0 : index
    %21 = vector.load %arg3[%c0_8, %c0_9] : memref<1x8xf32, #tpu.memory_space<vmem>>, vector<1x8xf32>
    %22 = vector.broadcast %21 : vector<1x8xf32> to vector<32x8xf32>
    %23 = arith.mulf %20, %22 : vector<32x8xf32>
    %c0_10 = arith.constant 0 : index
    %c0_11 = arith.constant 0 : index
    %24 = vector.load %arg4[%c0_10, %c0_11] : memref<1x8xf32, #tpu.memory_space<vmem>>, vector<1x8xf32>
    %25 = vector.broadcast %24 : vector<1x8xf32> to vector<32x8xf32>
    %26 = arith.addf %23, %25 : vector<32x8xf32>
    %cst_12 = arith.constant 0.000000e+00 : f32
    %27 = vector.broadcast %cst_12 : f32 to vector<32x8xf32>
    %28 = arith.maximumf %26, %27 : vector<32x8xf32>
    %c0_13 = arith.constant 0 : index
    %c0_14 = arith.constant 0 : index
    %29 = vector.load %arg5[%c0_13, %c0_14] : memref<8x16xf32, #tpu.memory_space<vmem>>, vector<8x16xf32>
    %cst_15 = arith.constant dense<0.000000e+00> : vector<32x16xf32>
    %30 = tpu.matmul %28, %29, %cst_15 {dimension_numbers = #tpu.dot_dimension_numbers<[1], [0], [0], [1], [0, 0, 1, 1], [], []>} : vector<32x8xf32>, vector<8x16xf32>, vector<32x16xf32> -> vector<32x16xf32>
    %cst_16 = arith.constant dense<0.000000e+00> : vector<16xf32>
    %31 = vector.multi_reduction <add>, %30, %cst_16 [0] : vector<32x16xf32> to vector<16xf32>
    %32 = vector.shape_cast %31 : vector<16xf32> to vector<1x16xf32>
    %cst_17 = arith.constant 3.125000e-02 : f32
    %33 = vector.broadcast %cst_17 : f32 to vector<1x16xf32>
    %34 = arith.mulf %32, %33 : vector<1x16xf32>
    %35 = arith.mulf %30, %30 : vector<32x16xf32>
    %cst_18 = arith.constant dense<0.000000e+00> : vector<16xf32>
    %36 = vector.multi_reduction <add>, %35, %cst_18 [0] : vector<32x16xf32> to vector<16xf32>
    %37 = vector.shape_cast %36 : vector<16xf32> to vector<1x16xf32>
    %cst_19 = arith.constant 3.125000e-02 : f32
    %38 = vector.broadcast %cst_19 : f32 to vector<1x16xf32>
    %39 = arith.mulf %37, %38 : vector<1x16xf32>
    %40 = vector.broadcast %34 : vector<1x16xf32> to vector<32x16xf32>
    %41 = arith.subf %30, %40 : vector<32x16xf32>
    %42 = arith.mulf %34, %34 : vector<1x16xf32>
    %43 = arith.subf %39, %42 : vector<1x16xf32>
    %cst_20 = arith.constant 1.000000e-03 : f32
    %44 = vector.broadcast %cst_20 : f32 to vector<1x16xf32>
    %45 = arith.addf %43, %44 : vector<1x16xf32>
    %46 = math.rsqrt %45 : vector<1x16xf32>
    %47 = vector.broadcast %46 : vector<1x16xf32> to vector<32x16xf32>
    %48 = arith.mulf %41, %47 : vector<32x16xf32>
    %c0_21 = arith.constant 0 : index
    %c0_22 = arith.constant 0 : index
    %49 = vector.load %arg6[%c0_21, %c0_22] : memref<1x16xf32, #tpu.memory_space<vmem>>, vector<1x16xf32>
    %50 = vector.broadcast %49 : vector<1x16xf32> to vector<32x16xf32>
    %51 = arith.mulf %48, %50 : vector<32x16xf32>
    %c0_23 = arith.constant 0 : index
    %c0_24 = arith.constant 0 : index
    %52 = vector.load %arg7[%c0_23, %c0_24] : memref<1x16xf32, #tpu.memory_space<vmem>>, vector<1x16xf32>
    %53 = vector.broadcast %52 : vector<1x16xf32> to vector<32x16xf32>
    %54 = arith.addf %51, %53 : vector<32x16xf32>
    %cst_25 = arith.constant 0.000000e+00 : f32
    %55 = vector.broadcast %cst_25 : f32 to vector<32x16xf32>
    %56 = arith.maximumf %54, %55 : vector<32x16xf32>
    %c0_26 = arith.constant 0 : index
    %c0_27 = arith.constant 0 : index
    %57 = vector.load %arg15[%c0_26, %c0_27] : memref<32x16xf32, #tpu.memory_space<vmem>>, vector<32x16xf32>
    tpu.vector_store %arg15[%c0_26, %c0_27], %56 {strides = array<i32>} : memref<32x16xf32, #tpu.memory_space<vmem>>, vector<32x16xf32>,
    %cst_28 = arith.constant 0.000000e+00 : f32
    %58 = vector.broadcast %cst_28 : f32 to vector<2x128xf32>
    %c0_29 = arith.constant 0 : index
    %c0_30 = arith.constant 0 : index
    %59 = vector.load %arg15[%c0_29, %c0_30] : memref<32x16xf32, #tpu.memory_space<vmem>>, vector<2x16xf32>
    %c0_31 = arith.constant 0 : index
    %c0_32 = arith.constant 0 : index
    %60 = vector.load %arg8[%c0_31, %c0_32] : memref<256x128xf32, #tpu.memory_space<vmem>>, vector<16x128xf32>
    %cst_33 = arith.constant dense<0.000000e+00> : vector<2x128xf32>
    %61 = tpu.matmul %59, %60, %cst_33 {dimension_numbers = #tpu.dot_dimension_numbers<[1], [0], [0], [1], [0, 0, 1, 1], [], []>} : vector<2x16xf32>, vector<16x128xf32>, vector<2x128xf32> -> vector<2x128xf32>
    %62 = arith.addf %58, %61 : vector<2x128xf32>
    %c2 = arith.constant 2 : index
    %c0_34 = arith.constant 0 : index
    %63 = vector.load %arg15[%c2, %c0_34] : memref<32x16xf32, #tpu.memory_space<vmem>>, vector<2x16xf32>
    %c16 = arith.constant 16 : index
    %c0_35 = arith.constant 0 : index
    %64 = vector.load %arg8[%c16, %c0_35] : memref<256x128xf32, #tpu.memory_space<vmem>>, vector<16x128xf32>
    %cst_36 = arith.constant dense<0.000000e+00> : vector<2x128xf32>
    %65 = tpu.matmul %63, %64, %cst_36 {dimension_numbers = #tpu.dot_dimension_numbers<[1], [0], [0], [1], [0, 0, 1, 1], [], []>} : vector<2x16xf32>, vector<16x128xf32>, vector<2x128xf32> -> vector<2x128xf32>
    %66 = arith.addf %62, %65 : vector<2x128xf32>
    %c4 = arith.constant 4 : index
    %c0_37 = arith.constant 0 : index
    %67 = vector.load %arg15[%c4, %c0_37] : memref<32x16xf32, #tpu.memory_space<vmem>>, vector<2x16xf32>
    %c32 = arith.constant 32 : index
    %c0_38 = arith.constant 0 : index
    %68 = vector.load %arg8[%c32, %c0_38] : memref<256x128xf32, #tpu.memory_space<vmem>>, vector<16x128xf32>
    %cst_39 = arith.constant dense<0.000000e+00> : vector<2x128xf32>
    %69 = tpu.matmul %67, %68, %cst_39 {dimension_numbers = #tpu.dot_dimension_numbers<[1], [0], [0], [1], [0, 0, 1, 1], [], []>} : vector<2x16xf32>, vector<16x128xf32>, vector<2x128xf32> -> vector<2x128xf32>
    %70 = arith.addf %66, %69 : vector<2x128xf32>
    %c6 = arith.constant 6 : index
    %c0_40 = arith.constant 0 : index
    %71 = vector.load %arg15[%c6, %c0_40] : memref<32x16xf32, #tpu.memory_space<vmem>>, vector<2x16xf32>
    %c48 = arith.constant 48 : index
    %c0_41 = arith.constant 0 : index
    %72 = vector.load %arg8[%c48, %c0_41] : memref<256x128xf32, #tpu.memory_space<vmem>>, vector<16x128xf32>
    %cst_42 = arith.constant dense<0.000000e+00> : vector<2x128xf32>
    %73 = tpu.matmul %71, %72, %cst_42 {dimension_numbers = #tpu.dot_dimension_numbers<[1], [0], [0], [1], [0, 0, 1, 1], [], []>} : vector<2x16xf32>, vector<16x128xf32>, vector<2x128xf32> -> vector<2x128xf32>
    %74 = arith.addf %70, %73 : vector<2x128xf32>
    %c8 = arith.constant 8 : index
    %c0_43 = arith.constant 0 : index
    %75 = vector.load %arg15[%c8, %c0_43] : memref<32x16xf32, #tpu.memory_space<vmem>>, vector<2x16xf32>
    %c64 = arith.constant 64 : index
    %c0_44 = arith.constant 0 : index
    %76 = vector.load %arg8[%c64, %c0_44] : memref<256x128xf32, #tpu.memory_space<vmem>>, vector<16x128xf32>
    %cst_45 = arith.constant dense<0.000000e+00> : vector<2x128xf32>
    %77 = tpu.matmul %75, %76, %cst_45 {dimension_numbers = #tpu.dot_dimension_numbers<[1], [0], [0], [1], [0, 0, 1, 1], [], []>} : vector<2x16xf32>, vector<16x128xf32>, vector<2x128xf32> -> vector<2x128xf32>
    %78 = arith.addf %74, %77 : vector<2x128xf32>
    %c10 = arith.constant 10 : index
    %c0_46 = arith.constant 0 : index
    %79 = vector.load %arg15[%c10, %c0_46] : memref<32x16xf32, #tpu.memory_space<vmem>>, vector<2x16xf32>
    %c80 = arith.constant 80 : index
    %c0_47 = arith.constant 0 : index
    %80 = vector.load %arg8[%c80, %c0_47] : memref<256x128xf32, #tpu.memory_space<vmem>>, vector<16x128xf32>
    %cst_48 = arith.constant dense<0.000000e+00> : vector<2x128xf32>
    %81 = tpu.matmul %79, %80, %cst_48 {dimension_numbers = #tpu.dot_dimension_numbers<[1], [0], [0], [1], [0, 0, 1, 1], [], []>} : vector<2x16xf32>, vector<16x128xf32>, vector<2x128xf32> -> vector<2x128xf32>
    %82 = arith.addf %78, %81 : vector<2x128xf32>
    %c12 = arith.constant 12 : index
    %c0_49 = arith.constant 0 : index
    %83 = vector.load %arg15[%c12, %c0_49] : memref<32x16xf32, #tpu.memory_space<vmem>>, vector<2x16xf32>
    %c96 = arith.constant 96 : index
    %c0_50 = arith.constant 0 : index
    %84 = vector.load %arg8[%c96, %c0_50] : memref<256x128xf32, #tpu.memory_space<vmem>>, vector<16x128xf32>
    %cst_51 = arith.constant dense<0.000000e+00> : vector<2x128xf32>
    %85 = tpu.matmul %83, %84, %cst_51 {dimension_numbers = #tpu.dot_dimension_numbers<[1], [0], [0], [1], [0, 0, 1, 1], [], []>} : vector<2x16xf32>, vector<16x128xf32>, vector<2x128xf32> -> vector<2x128xf32>
    %86 = arith.addf %82, %85 : vector<2x128xf32>
    %c14 = arith.constant 14 : index
    %c0_52 = arith.constant 0 : index
    %87 = vector.load %arg15[%c14, %c0_52] : memref<32x16xf32, #tpu.memory_space<vmem>>, vector<2x16xf32>
    %c112 = arith.constant 112 : index
    %c0_53 = arith.constant 0 : index
    %88 = vector.load %arg8[%c112, %c0_53] : memref<256x128xf32, #tpu.memory_space<vmem>>, vector<16x128xf32>
    %cst_54 = arith.constant dense<0.000000e+00> : vector<2x128xf32>
    %89 = tpu.matmul %87, %88, %cst_54 {dimension_numbers = #tpu.dot_dimension_numbers<[1], [0], [0], [1], [0, 0, 1, 1], [], []>} : vector<2x16xf32>, vector<16x128xf32>, vector<2x128xf32> -> vector<2x128xf32>
    %90 = arith.addf %86, %89 : vector<2x128xf32>
    %c16_55 = arith.constant 16 : index
    %c0_56 = arith.constant 0 : index
    %91 = vector.load %arg15[%c16_55, %c0_56] : memref<32x16xf32, #tpu.memory_space<vmem>>, vector<2x16xf32>
    %c128 = arith.constant 128 : index
    %c0_57 = arith.constant 0 : index
    %92 = vector.load %arg8[%c128, %c0_57] : memref<256x128xf32, #tpu.memory_space<vmem>>, vector<16x128xf32>
    %cst_58 = arith.constant dense<0.000000e+00> : vector<2x128xf32>
    %93 = tpu.matmul %91, %92, %cst_58 {dimension_numbers = #tpu.dot_dimension_numbers<[1], [0], [0], [1], [0, 0, 1, 1], [], []>} : vector<2x16xf32>, vector<16x128xf32>, vector<2x128xf32> -> vector<2x128xf32>
    %94 = arith.addf %90, %93 : vector<2x128xf32>
    %c18 = arith.constant 18 : index
    %c0_59 = arith.constant 0 : index
    %95 = vector.load %arg15[%c18, %c0_59] : memref<32x16xf32, #tpu.memory_space<vmem>>, vector<2x16xf32>
    %c144 = arith.constant 144 : index
    %c0_60 = arith.constant 0 : index
    %96 = vector.load %arg8[%c144, %c0_60] : memref<256x128xf32, #tpu.memory_space<vmem>>, vector<16x128xf32>
    %cst_61 = arith.constant dense<0.000000e+00> : vector<2x128xf32>
    %97 = tpu.matmul %95, %96, %cst_61 {dimension_numbers = #tpu.dot_dimension_numbers<[1], [0], [0], [1], [0, 0, 1, 1], [], []>} : vector<2x16xf32>, vector<16x128xf32>, vector<2x128xf32> -> vector<2x128xf32>
    %98 = arith.addf %94, %97 : vector<2x128xf32>
    %c20 = arith.constant 20 : index
    %c0_62 = arith.constant 0 : index
    %99 = vector.load %arg15[%c20, %c0_62] : memref<32x16xf32, #tpu.memory_space<vmem>>, vector<2x16xf32>
    %c160 = arith.constant 160 : index
    %c0_63 = arith.constant 0 : index
    %100 = vector.load %arg8[%c160, %c0_63] : memref<256x128xf32, #tpu.memory_space<vmem>>, vector<16x128xf32>
    %cst_64 = arith.constant dense<0.000000e+00> : vector<2x128xf32>
    %101 = tpu.matmul %99, %100, %cst_64 {dimension_numbers = #tpu.dot_dimension_numbers<[1], [0], [0], [1], [0, 0, 1, 1], [], []>} : vector<2x16xf32>, vector<16x128xf32>, vector<2x128xf32> -> vector<2x128xf32>
    %102 = arith.addf %98, %101 : vector<2x128xf32>
    %c22 = arith.constant 22 : index
    %c0_65 = arith.constant 0 : index
    %103 = vector.load %arg15[%c22, %c0_65] : memref<32x16xf32, #tpu.memory_space<vmem>>, vector<2x16xf32>
    %c176 = arith.constant 176 : index
    %c0_66 = arith.constant 0 : index
    %104 = vector.load %arg8[%c176, %c0_66] : memref<256x128xf32, #tpu.memory_space<vmem>>, vector<16x128xf32>
    %cst_67 = arith.constant dense<0.000000e+00> : vector<2x128xf32>
    %105 = tpu.matmul %103, %104, %cst_67 {dimension_numbers = #tpu.dot_dimension_numbers<[1], [0], [0], [1], [0, 0, 1, 1], [], []>} : vector<2x16xf32>, vector<16x128xf32>, vector<2x128xf32> -> vector<2x128xf32>
    %106 = arith.addf %102, %105 : vector<2x128xf32>
    %c24 = arith.constant 24 : index
    %c0_68 = arith.constant 0 : index
    %107 = vector.load %arg15[%c24, %c0_68] : memref<32x16xf32, #tpu.memory_space<vmem>>, vector<2x16xf32>
    %c192 = arith.constant 192 : index
    %c0_69 = arith.constant 0 : index
    %108 = vector.load %arg8[%c192, %c0_69] : memref<256x128xf32, #tpu.memory_space<vmem>>, vector<16x128xf32>
    %cst_70 = arith.constant dense<0.000000e+00> : vector<2x128xf32>
    %109 = tpu.matmul %107, %108, %cst_70 {dimension_numbers = #tpu.dot_dimension_numbers<[1], [0], [0], [1], [0, 0, 1, 1], [], []>} : vector<2x16xf32>, vector<16x128xf32>, vector<2x128xf32> -> vector<2x128xf32>
    %110 = arith.addf %106, %109 : vector<2x128xf32>
    %c26 = arith.constant 26 : index
    %c0_71 = arith.constant 0 : index
    %111 = vector.load %arg15[%c26, %c0_71] : memref<32x16xf32, #tpu.memory_space<vmem>>, vector<2x16xf32>
    %c208 = arith.constant 208 : index
    %c0_72 = arith.constant 0 : index
    %112 = vector.load %arg8[%c208, %c0_72] : memref<256x128xf32, #tpu.memory_space<vmem>>, vector<16x128xf32>
    %cst_73 = arith.constant dense<0.000000e+00> : vector<2x128xf32>
    %113 = tpu.matmul %111, %112, %cst_73 {dimension_numbers = #tpu.dot_dimension_numbers<[1], [0], [0], [1], [0, 0, 1, 1], [], []>} : vector<2x16xf32>, vector<16x128xf32>, vector<2x128xf32> -> vector<2x128xf32>
    %114 = arith.addf %110, %113 : vector<2x128xf32>
    %c28 = arith.constant 28 : index
    %c0_74 = arith.constant 0 : index
    %115 = vector.load %arg15[%c28, %c0_74] : memref<32x16xf32, #tpu.memory_space<vmem>>, vector<2x16xf32>
    %c224 = arith.constant 224 : index
    %c0_75 = arith.constant 0 : index
    %116 = vector.load %arg8[%c224, %c0_75] : memref<256x128xf32, #tpu.memory_space<vmem>>, vector<16x128xf32>
    %cst_76 = arith.constant dense<0.000000e+00> : vector<2x128xf32>
    %117 = tpu.matmul %115, %116, %cst_76 {dimension_numbers = #tpu.dot_dimension_numbers<[1], [0], [0], [1], [0, 0, 1, 1], [], []>} : vector<2x16xf32>, vector<16x128xf32>, vector<2x128xf32> -> vector<2x128xf32>
    %118 = arith.addf %114, %117 : vector<2x128xf32>
    %c30 = arith.constant 30 : index
    %c0_77 = arith.constant 0 : index
    %119 = vector.load %arg15[%c30, %c0_77] : memref<32x16xf32, #tpu.memory_space<vmem>>, vector<2x16xf32>
    %c240 = arith.constant 240 : index
    %c0_78 = arith.constant 0 : index
    %120 = vector.load %arg8[%c240, %c0_78] : memref<256x128xf32, #tpu.memory_space<vmem>>, vector<16x128xf32>
    %cst_79 = arith.constant dense<0.000000e+00> : vector<2x128xf32>
    %121 = tpu.matmul %119, %120, %cst_79 {dimension_numbers = #tpu.dot_dimension_numbers<[1], [0], [0], [1], [0, 0, 1, 1], [], []>} : vector<2x16xf32>, vector<16x128xf32>, vector<2x128xf32> -> vector<2x128xf32>
    %122 = arith.addf %118, %121 : vector<2x128xf32>
    %c0_80 = arith.constant 0 : index
    %c0_81 = arith.constant 0 : index
    %123 = vector.load %arg9[%c0_80, %c0_81] : memref<1x128xf32, #tpu.memory_space<vmem>>, vector<1x128xf32>
    %124 = vector.broadcast %123 : vector<1x128xf32> to vector<2x128xf32>
    %125 = arith.addf %122, %124 : vector<2x128xf32>
    %cst_82 = arith.constant 0.000000e+00 : f32
    %126 = vector.broadcast %cst_82 : f32 to vector<2x128xf32>
    %127 = arith.maximumf %125, %126 : vector<2x128xf32>
    %c0_83 = arith.constant 0 : index
    %c0_84 = arith.constant 0 : index
    %128 = vector.load %arg10[%c0_83, %c0_84] : memref<128x64xf32, #tpu.memory_space<vmem>>, vector<128x64xf32>
    %cst_85 = arith.constant dense<0.000000e+00> : vector<2x64xf32>
    %129 = tpu.matmul %127, %128, %cst_85 {dimension_numbers = #tpu.dot_dimension_numbers<[1], [0], [0], [1], [0, 0, 1, 1], [], []>} : vector<2x128xf32>, vector<128x64xf32>, vector<2x64xf32> -> vector<2x64xf32>
    %c0_86 = arith.constant 0 : index
    %c0_87 = arith.constant 0 : index
    %130 = vector.load %arg11[%c0_86, %c0_87] : memref<1x64xf32, #tpu.memory_space<vmem>>, vector<1x64xf32>
    %131 = vector.broadcast %130 : vector<1x64xf32> to vector<2x64xf32>
    %132 = arith.addf %129, %131 : vector<2x64xf32>
    %cst_88 = arith.constant 0.000000e+00 : f32
    %133 = vector.broadcast %cst_88 : f32 to vector<2x64xf32>
    %134 = arith.maximumf %132, %133 : vector<2x64xf32>
    %c0_89 = arith.constant 0 : index
    %c0_90 = arith.constant 0 : index
    %135 = vector.load %arg12[%c0_89, %c0_90] : memref<64x128xf32, #tpu.memory_space<vmem>>, vector<64x128xf32>
    %cst_91 = arith.constant dense<0.000000e+00> : vector<2x128xf32>
    %136 = tpu.matmul %134, %135, %cst_91 {dimension_numbers = #tpu.dot_dimension_numbers<[1], [0], [0], [1], [0, 0, 1, 1], [], []>} : vector<2x64xf32>, vector<64x128xf32>, vector<2x128xf32> -> vector<2x128xf32>
    %c0_92 = arith.constant 0 : index
    %c0_93 = arith.constant 0 : index
    %137 = vector.load %arg13[%c0_92, %c0_93] : memref<1x128xf32, #tpu.memory_space<vmem>>, vector<1x128xf32>
    %138 = vector.broadcast %137 : vector<1x128xf32> to vector<2x128xf32>
    %139 = arith.addf %136, %138 : vector<2x128xf32>
    %140 = vector.extract_strided_slice %139 {offsets = [0, 16], sizes = [2, 1], strides = [1, 1]} : vector<2x128xf32> to vector<2x1xf32>
    %141 = vector.shape_cast %139 : vector<2x128xf32> to vector<1x2x128xf32>
    %cst_94 = arith.constant dense<0.000000e+00> : vector<1xf32>
    %142 = vector.multi_reduction <add>, %141, %cst_94 [1, 2] : vector<1x2x128xf32> to vector<1xf32>
    %143 = vector.shape_cast %142 : vector<1xf32> to vector<1x1x1xf32>
    %144 = vector.extract %143[0, 0, 0] : f32 from vector<1x1x1xf32>
    %145 = vector.shape_cast %140 : vector<2x1xf32> to vector<1x2x1xf32>
    %cst_95 = arith.constant dense<0.000000e+00> : vector<1xf32>
    %146 = vector.multi_reduction <add>, %145, %cst_95 [1, 2] : vector<1x2x1xf32> to vector<1xf32>
    %147 = vector.shape_cast %146 : vector<1xf32> to vector<1x1x1xf32>
    %148 = vector.extract %147[0, 0, 0] : f32 from vector<1x1x1xf32>
    %149 = arith.subf %144, %148 : f32
    %cst_96 = arith.constant 3.125000e-02 : f32
    %150 = arith.mulf %149, %cst_96 : f32
    %151 = vector.broadcast %150 : f32 to vector<2x1xf32>
    %152 = arith.subf %140, %151 : vector<2x1xf32>
    %153 = vector.broadcast %152 : vector<2x1xf32> to vector<2x128xf32>
    %154 = arith.addf %139, %153 : vector<2x128xf32>
    %c0_97 = arith.constant 0 : index
    %c0_98 = arith.constant 0 : index
    %155 = vector.load %arg14[%c0_97, %c0_98] : memref<2x128xf32, #tpu.memory_space<vmem>>, vector<2x128xf32>
    tpu.vector_store %arg14[%c0_97, %c0_98], %154 {strides = array<i32>} : memref<2x128xf32, #tpu.memory_space<vmem>>, vector<2x128xf32>,
    return
  }
  func.func @transform_0(%arg0: i32) -> (i32, i32) {
    %c0_i32 = arith.constant 0 : i32
    %c0_i32_0 = arith.constant 0 : i32
    %c0_i32_1 = arith.constant 0 : i32
    return %c0_i32, %c0_i32_0 : i32, i32
  }
  func.func @transform_1(%arg0: i32) -> (i32, i32) {
    %c0_i32 = arith.constant 0 : i32
    %c0_i32_0 = arith.constant 0 : i32
    %c0_i32_1 = arith.constant 0 : i32
    return %c0_i32, %c0_i32_0 : i32, i32
  }
  func.func @transform_2(%arg0: i32) -> (i32, i32) {
    %c0_i32 = arith.constant 0 : i32
    %c0_i32_0 = arith.constant 0 : i32
    %c0_i32_1 = arith.constant 0 : i32
    return %c0_i32, %c0_i32_0 : i32, i32
  }
  func.func @transform_3(%arg0: i32) -> (i32, i32) {
    %c0_i32 = arith.constant 0 : i32
    %c0_i32_0 = arith.constant 0 : i32
    %c0_i32_1 = arith.constant 0 : i32
    return %c0_i32, %c0_i32_0 : i32, i32
  }
  func.func @transform_4(%arg0: i32) -> (i32, i32) {
    %c0_i32 = arith.constant 0 : i32
    %c0_i32_0 = arith.constant 0 : i32
    %c0_i32_1 = arith.constant 0 : i32
    return %c0_i32, %c0_i32_0 : i32, i32
  }
  func.func @transform_5(%arg0: i32) -> (i32, i32) {
    %c0_i32 = arith.constant 0 : i32
    %c0_i32_0 = arith.constant 0 : i32
    %c0_i32_1 = arith.constant 0 : i32
    return %c0_i32, %c0_i32_0 : i32, i32
  }
  func.func @transform_6(%arg0: i32) -> (i32, i32) {
    %c0_i32 = arith.constant 0 : i32
    %c0_i32_0 = arith.constant 0 : i32
    %c0_i32_1 = arith.constant 0 : i32
    return %c0_i32, %c0_i32_0 : i32, i32
  }
  func.func @transform_7(%arg0: i32) -> (i32, i32) {
    %c0_i32 = arith.constant 0 : i32
    %c0_i32_0 = arith.constant 0 : i32
    %c0_i32_1 = arith.constant 0 : i32
    return %c0_i32, %c0_i32_0 : i32, i32
  }
  func.func @transform_8(%arg0: i32) -> (i32, i32) {
    %c0_i32 = arith.constant 0 : i32
    %c0_i32_0 = arith.constant 0 : i32
    %c0_i32_1 = arith.constant 0 : i32
    return %c0_i32, %c0_i32_0 : i32, i32
  }
  func.func @transform_9(%arg0: i32) -> (i32, i32) {
    %c0_i32 = arith.constant 0 : i32
    %c0_i32_0 = arith.constant 0 : i32
    %c0_i32_1 = arith.constant 0 : i32
    return %c0_i32, %c0_i32_0 : i32, i32
  }
  func.func @transform_10(%arg0: i32) -> (i32, i32) {
    %c0_i32 = arith.constant 0 : i32
    %c0_i32_0 = arith.constant 0 : i32
    %c0_i32_1 = arith.constant 0 : i32
    return %c0_i32, %c0_i32_0 : i32, i32
  }
  func.func @transform_11(%arg0: i32) -> (i32, i32) {
    %c0_i32 = arith.constant 0 : i32
    %c0_i32_0 = arith.constant 0 : i32
    %c0_i32_1 = arith.constant 0 : i32
    return %c0_i32, %c0_i32_0 : i32, i32
  }
  func.func @transform_12(%arg0: i32) -> (i32, i32) {
    %c0_i32 = arith.constant 0 : i32
    %c0_i32_0 = arith.constant 0 : i32
    %c0_i32_1 = arith.constant 0 : i32
    return %c0_i32, %c0_i32_0 : i32, i32
  }
  func.func @transform_13(%arg0: i32) -> (i32, i32) {
    %c0_i32 = arith.constant 0 : i32
    %c0_i32_0 = arith.constant 0 : i32
    %c0_i32_1 = arith.constant 0 : i32
    return %c0_i32, %c0_i32_0 : i32, i32
  }
}

</mosaic_0001>

<llo_original>
// kernel: dueling_dqn_forward.1
$region0: #{dueling_dqn_forward.1}
  #allocation0 [shape = 'u32[]', space=smem, size = 0x4, offset = 0x4, fixed_abs, tag = 'smem constant byte address 0x4 - core index']
  #allocation1 [shape = 'u32[144,128]{1,0:T(1,128)}', space=vmem, size = 0x12000, scoped, tag = 'internal scratch']
  #allocation2 [shape = 'f32[32,16]{1,0:T(8,128)}', space=vmem, size = 0x4000, scoped, tag = 'scratch operand']
  %s0 = inlined_call_operand.vmem [shape: f32[32,16], index: 0, kind: input, shape index: {}]
  %s1 = inlined_call_operand.vmem [shape: f32[16,8], index: 1, kind: input, shape index: {}]
  %s2 = inlined_call_operand.vmem [shape: f32[1,8], index: 2, kind: input, shape index: {}]
  %s3 = inlined_call_operand.vmem [shape: f32[1,8], index: 3, kind: input, shape index: {}]
  %s4 = inlined_call_operand.vmem [shape: f32[8,16], index: 4, kind: input, shape index: {}]
  %s5 = inlined_call_operand.vmem [shape: f32[1,16], index: 5, kind: input, shape index: {}]
  %s6 = inlined_call_operand.vmem [shape: f32[1,16], index: 6, kind: input, shape index: {}]
  %s7 = inlined_call_operand.vmem [shape: f32[256,128], index: 7, kind: input, shape index: {}]
  %s8 = inlined_call_operand.vmem [shape: f32[1,128], index: 8, kind: input, shape index: {}]
  %s9 = inlined_call_operand.vmem [shape: f32[128,64], index: 9, kind: input, shape index: {}]
  %s10 = inlined_call_operand.vmem [shape: f32[1,64], index: 10, kind: input, shape index: {}]
  %s11 = inlined_call_operand.vmem [shape: f32[64,128], index: 11, kind: input, shape index: {}]
  %s12 = inlined_call_operand.vmem [shape: f32[1,128], index: 12, kind: input, shape index: {}]
  %s13 = inlined_call_operand.hbm [shape: f32[2,128], index: 13, kind: output, shape index: {}]
  %s14 = sld [smem:[#allocation0]]
  $region62: #{dueling_dqn_forward.1} parent=0
    _
  %s16 = ssub.s32 1, %s14
  %s17 = scalar_select 0, %s16, %s14
  $region1: #{dueling_dqn_forward.1} parent=0
    #allocation3 [shape = 'u8[1024]{0}', space=vmem, size = 0x400, scoped, tag = 'output window, operand 0, single buffered']
    #allocation4 [shape = 's32[1]{0}', space=sflag, size = 0x4, scoped, tag = 'scoped memory for dueling_dqn_forward.1']
    %18 = vsyncpa [#allocation4], 0
    // Predicated region
    $region2: #{dueling_dqn_forward.1} parent=1 // pred_check
      _
    $region3: #{dueling_dqn_forward.1} parent=1 // pred_check_branch
      %20 = sbr.rel (0) target = $region5
    $region4: #{dueling_dqn_forward.1} parent=1 // pred_region
      _
    $region5: #{dueling_dqn_forward.1} parent=1 // pred_fallthru
      _
    // Predicated region
    $region6: #{dueling_dqn_forward.1} parent=1 // pred_check
      _
    $region7: #{dueling_dqn_forward.1} parent=1 // pred_check_branch
      %22 = sbr.rel (0) target = $region9
    $region8: #{dueling_dqn_forward.1} parent=1 // pred_region
      _
    $region9: #{dueling_dqn_forward.1} parent=1 // pred_fallthru
      _
    // Predicated region
    $region10: #{dueling_dqn_forward.1} parent=1 // pred_check
      _
    $region11: #{dueling_dqn_forward.1} parent=1 // pred_check_branch
      %24 = sbr.rel (0) target = $region13
    $region12: #{dueling_dqn_forward.1} parent=1 // pred_region
      _
    $region13: #{dueling_dqn_forward.1} parent=1 // pred_fallthru
      _
    // Predicated region
    $region14: #{dueling_dqn_forward.1} parent=1 // pred_check
      _
    $region15: #{dueling_dqn_forward.1} parent=1 // pred_check_branch
      %26 = sbr.rel (0) target = $region17
    $region16: #{dueling_dqn_forward.1} parent=1 // pred_region
      _
    $region17: #{dueling_dqn_forward.1} parent=1 // pred_fallthru
      _
    // Predicated region
    $region18: #{dueling_dqn_forward.1} parent=1 // pred_check
      _
    $region19: #{dueling_dqn_forward.1} parent=1 // pred_check_branch
      %28 = sbr.rel (0) target = $region21
    $region20: #{dueling_dqn_forward.1} parent=1 // pred_region
      _
    $region21: #{dueling_dqn_forward.1} parent=1 // pred_fallthru
      _
    // Predicated region
    $region22: #{dueling_dqn_forward.1} parent=1 // pred_check
      _
    $region23: #{dueling_dqn_forward.1} parent=1 // pred_check_branch
      %30 = sbr.rel (0) target = $region25
    $region24: #{dueling_dqn_forward.1} parent=1 // pred_region
      _
    $region25: #{dueling_dqn_forward.1} parent=1 // pred_fallthru
      _
    // Predicated region
    $region26: #{dueling_dqn_forward.1} parent=1 // pred_check
      _
    $region27: #{dueling_dqn_forward.1} parent=1 // pred_check_branch
      %32 = sbr.rel (0) target = $region29
    $region28: #{dueling_dqn_forward.1} parent=1 // pred_region
      _
    $region29: #{dueling_dqn_forward.1} parent=1 // pred_fallthru
      _
    // Predicated region
    $region30: #{dueling_dqn_forward.1} parent=1 // pred_check
      _
    $region31: #{dueling_dqn_forward.1} parent=1 // pred_check_branch
      %34 = sbr.rel (0) target = $region33
    $region32: #{dueling_dqn_forward.1} parent=1 // pred_region
      _
    $region33: #{dueling_dqn_forward.1} parent=1 // pred_fallthru
      _
    // Predicated region
    $region34: #{dueling_dqn_forward.1} parent=1 // pred_check
      _
    $region35: #{dueling_dqn_forward.1} parent=1 // pred_check_branch
      %36 = sbr.rel (0) target = $region37
    $region36: #{dueling_dqn_forward.1} parent=1 // pred_region
      _
    $region37: #{dueling_dqn_forward.1} parent=1 // pred_fallthru
      _
    // Predicated region
    $region38: #{dueling_dqn_forward.1} parent=1 // pred_check
      _
    $region39: #{dueling_dqn_forward.1} parent=1 // pred_check_branch
      %38 = sbr.rel (0) target = $region41
    $region40: #{dueling_dqn_forward.1} parent=1 // pred_region
      _
    $region41: #{dueling_dqn_forward.1} parent=1 // pred_fallthru
      _
    // Predicated region
    $region42: #{dueling_dqn_forward.1} parent=1 // pred_check
      _
    $region43: #{dueling_dqn_forward.1} parent=1 // pred_check_branch
      %40 = sbr.rel (0) target = $region45
    $region44: #{dueling_dqn_forward.1} parent=1 // pred_region
      _
    $region45: #{dueling_dqn_forward.1} parent=1 // pred_fallthru
      _
    // Predicated region
    $region46: #{dueling_dqn_forward.1} parent=1 // pred_check
      _
    $region47: #{dueling_dqn_forward.1} parent=1 // pred_check_branch
      %42 = sbr.rel (0) target = $region49
    $region48: #{dueling_dqn_forward.1} parent=1 // pred_region
      _
    $region49: #{dueling_dqn_forward.1} parent=1 // pred_fallthru
      _
    // Predicated region
    $region50: #{dueling_dqn_forward.1} parent=1 // pred_check
      _
    $region51: #{dueling_dqn_forward.1} parent=1 // pred_check_branch
      %44 = sbr.rel (0) target = $region53
    $region52: #{dueling_dqn_forward.1} parent=1 // pred_region
      _
    $region53: #{dueling_dqn_forward.1} parent=1 // pred_fallthru
      _
    %v45 = vld [vmem:[%s0] sm:$0xff]
    %v46 = vld [vmem:[%s0 + $0x8] sm:$0xff]
    %v47 = vld [vmem:[%s0 + $0x10] sm:$0xff]
    %v48 = vld [vmem:[%s0 + $0x18] sm:$0xff]
    %v49 = vld [vmem:[%s1] sm:$0xff]
    %v50 = vld [vmem:[%s1 + $0x8] sm:$0xff]
    %vm51 = vcmask 130048
    %v53 = vsel %vm51, %v45, 0
    %v56 = vsel %vm51, %v46, 0
    %v59 = vsel %vm51, %v47, 0
    %v62 = vsel %vm51, %v48, 0
    %64 = vmatprep.subr.mxu0 0.0
    %65 = vmatpush1.msra.mxu0 %v49
    %66 = vmatprep.subr.mxu0 0.0
    %67 = vmatpush1.msra.mxu0 %v50
    %68 = vmatprep.subr.mxu0 0.0
    %69 = vmatpush1.msra.mxu0 0.0
    %70 = vmatprep.subr.mxu0 0.0
    %71 = vmatpush1.msra.mxu0 0.0
    %72 = vmatprep.subr.mxu0 0.0
    %73 = vmatpush1.msra.mxu0 0.0
    %74 = vmatprep.subr.mxu0 0.0
    %75 = vmatpush1.msra.mxu0 0.0
    %76 = vmatprep.subr.mxu0 0.0
    %77 = vmatpush1.msra.mxu0 0.0
    %78 = vmatprep.subr.mxu0 0.0
    %79 = vmatpush1.msra.mxu0 0.0
    %80 = vmatprep.subr.mxu0 0.0
    %81 = vmatpush1.msra.mxu0 0.0
    %82 = vmatprep.subr.mxu0 0.0
    %83 = vmatpush1.msra.mxu0 0.0
    %84 = vmatprep.subr.mxu0 0.0
    %85 = vmatpush1.msra.mxu0 0.0
    %86 = vmatprep.subr.mxu0 0.0
    %87 = vmatpush1.msra.mxu0 0.0
    %88 = vmatprep.subr.mxu0 0.0
    %89 = vmatpush1.msra.mxu0 0.0
    %90 = vmatprep.subr.mxu0 0.0
    %91 = vmatpush1.msra.mxu0 0.0
    %92 = vmatprep.subr.mxu0 0.0
    %93 = vmatpush1.msra.mxu0 0.0
    %94 = vmatprep.subr.mxu0 0.0
    %95 = vmatpush1.msra.mxu0 0.0
    %96 = vmatprep.subr.mxu0 0.0
    %97 = vmatpush1.msra.mxu0 0.0
    %98 = vmatprep.subr.mxu0 0.0
    %99 = vmatpush1.msra.mxu0 0.0
    %100 = vmatprep.subr.mxu0 0.0
    %101 = vmatpush1.msra.mxu0 0.0
    %102 = vmatprep.subr.mxu0 0.0
    %103 = vmatpush1.msra.mxu0 0.0
    %104 = vmatprep.subr.mxu0 0.0
    %105 = vmatpush1.msra.mxu0 0.0
    %106 = vmatprep.subr.mxu0 0.0
    %107 = vmatpush1.msra.mxu0 0.0
    %108 = vmatprep.subr.mxu0 0.0
    %109 = vmatpush1.msra.mxu0 0.0
    %110 = vmatprep.subr.mxu0 0.0
    %111 = vmatpush1.msra.mxu0 0.0
    %112 = vmatprep.subr.mxu0 0.0
    %113 = vmatpush1.msra.mxu0 0.0
    %114 = vmatprep.subr.mxu0 0.0
    %115 = vmatpush1.msra.mxu0 0.0
    %116 = vmatprep.subr.mxu0 0.0
    %117 = vmatpush1.msra.mxu0 0.0
    %118 = vmatprep.subr.mxu0 0.0
    %119 = vmatpush1.msra.mxu0 0.0
    %120 = vmatprep.subr.mxu0 0.0
    %121 = vmatpush1.msra.mxu0 0.0
    %122 = vmatprep.subr.mxu0 0.0
    %123 = vmatpush1.msra.mxu0 0.0
    %124 = vmatprep.subr.mxu0 0.0
    %125 = vmatpush1.msra.mxu0 0.0
    %126 = vmatprep.subr.mxu0 0.0
    %127 = vmatpush1.msra.mxu0 0.0
    %128 = vmatprep.mubr.f32.mxu0 0.0
    %129 = vmatmul.mubr.f32.gmra.mrb[0].mxu0 %v53
    %v130 = vpop.f32.mrb[0].mxu0
    %v131 = vadd.f32 0.0, %v130
    %v132 = vpop.f32.mrb[0].mxu0
    %133 = vmatprep.mubr.f32.mxu0 0.0
    %134 = vmatmul.mubr.f32.gmra.mrb[0].mxu0 %v56
    %v135 = vpop.f32.mrb[0].mxu0
    %v136 = vadd.f32 0.0, %v135
    %v137 = vpop.f32.mrb[0].mxu0
    %138 = vmatprep.mubr.f32.mxu0 0.0
    %139 = vmatmul.mubr.f32.gmra.mrb[0].mxu0 %v59
    %v140 = vpop.f32.mrb[0].mxu0
    %v141 = vadd.f32 0.0, %v140
    %v142 = vpop.f32.mrb[0].mxu0
    %143 = vmatprep.mubr.f32.mxu0 0.0
    %144 = vmatmul.mubr.f32.gmra.mrb[0].mxu0 %v62
    %v145 = vpop.f32.mrb[0].mxu0
    %v146 = vadd.f32 0.0, %v145
    %v147 = vpop.f32.mrb[0].mxu0
    %148 = vdwg.mxu0
    %vm149 = vcmask 64512
    %v150 = vsel %vm149, %v131, 0.0
    %v151 = vsel %vm149, %v136, 0.0
    %v152 = vadd.f32 %v150, %v151
    %v153 = vsel %vm149, %v141, 0.0
    %v154 = vadd.f32 %v152, %v153
    %v155 = vsel %vm149, %v146, 0.0
    %v156 = vadd.f32 %v154, %v155
    %v157 = vrot.slane %v156, 4
    %v158 = vadd.f32 %v156, %v157
    %v159 = vrot.slane %v158, 2
    %v160 = vadd.f32 %v158, %v159
    %v161 = vrot.slane %v160, 1
    %v162 = vadd.f32 %v160, %v161
    %v163 = vmul.f32 %v162, 0.03125
    %v164 = vmul.f32 %v131, %v131
    %v165 = vmul.f32 %v136, %v136
    %v166 = vmul.f32 %v141, %v141
    %v167 = vmul.f32 %v146, %v146
    %v168 = vsel %vm149, %v164, 0.0
    %v169 = vsel %vm149, %v165, 0.0
    %v170 = vadd.f32 %v168, %v169
    %v171 = vsel %vm149, %v166, 0.0
    %v172 = vadd.f32 %v170, %v171
    %v173 = vsel %vm149, %v167, 0.0
    %v174 = vadd.f32 %v172, %v173
    %v175 = vrot.slane %v174, 4
    %v176 = vadd.f32 %v174, %v175
    %v177 = vrot.slane %v176, 2
    %v178 = vadd.f32 %v176, %v177
    %v179 = vrot.slane %v178, 1
    %v180 = vadd.f32 %v178, %v179
    %v181 = vmul.f32 %v180, 0.03125
    %v182 = vsub.f32 %v131, %v163
    %v183 = vsub.f32 %v136, %v163
    %v184 = vsub.f32 %v141, %v163
    %v185 = vsub.f32 %v146, %v163
    %v186 = vmul.f32 %v163, %v163
    %v187 = vsub.f32 %v181, %v186
    %v188 = vadd.f32 %v187, 0.001
    %v189 = vrsqrt.pop %v188
    %v190 = vmul.f32 %v182, %v189
    %v191 = vmul.f32 %v183, %v189
    %v192 = vmul.f32 %v184, %v189
    %v193 = vmul.f32 %v185, %v189
    %v194 = vld [vmem:[%s2] sm:$0x1]
    %v196 = vlaneseq
    %v197 = vshrl.u32 %v196, 7
    %v198 = vsub.s32 0, %v197
    %v199 = vrot.slane %v194, %v198
    %v201 = vmul.f32 %v190, %v199
    %v202 = vmul.f32 %v191, %v199
    %v203 = vmul.f32 %v192, %v199
    %v204 = vmul.f32 %v193, %v199
    %v205 = vld [vmem:[%s3] sm:$0x1]
    %v207 = vlaneseq
    %v208 = vshrl.u32 %v207, 7
    %v209 = vsub.s32 0, %v208
    %v210 = vrot.slane %v205, %v209
    %v212 = vadd.f32 %v201, %v210
    %v213 = vadd.f32 %v202, %v210
    %v214 = vadd.f32 %v203, %v210
    %v215 = vadd.f32 %v204, %v210
    %v216 = vmax.f32 %v212, 0.0
    %v217 = vmax.f32 %v213, 0.0
    %v218 = vmax.f32 %v214, 0.0
    %v219 = vmax.f32 %v215, 0.0
    %v220 = vld [vmem:[%s4] sm:$0xff]
    %v222 = vsel %vm149, %v216, 0
    %v225 = vsel %vm149, %v217, 0
    %v228 = vsel %vm149, %v218, 0
    %v231 = vsel %vm149, %v219, 0
    %233 = vmatprep.subr.mxu0 0.0
    %234 = vmatpush1.msra.mxu0 %v220
    %235 = vmatprep.subr.mxu0 0.0
    %236 = vmatpush1.msra.mxu0 0.0
    %237 = vmatprep.subr.mxu0 0.0
    %238 = vmatpush1.msra.mxu0 0.0
    %239 = vmatprep.subr.mxu0 0.0
    %240 = vmatpush1.msra.mxu0 0.0
    %241 = vmatprep.subr.mxu0 0.0
    %242 = vmatpush1.msra.mxu0 0.0
    %243 = vmatprep.subr.mxu0 0.0
    %244 = vmatpush1.msra.mxu0 0.0
    %245 = vmatprep.subr.mxu0 0.0
    %246 = vmatpush1.msra.mxu0 0.0
    %247 = vmatprep.subr.mxu0 0.0
    %248 = vmatpush1.msra.mxu0 0.0
    %249 = vmatprep.subr.mxu0 0.0
    %250 = vmatpush1.msra.mxu0 0.0
    %251 = vmatprep.subr.mxu0 0.0
    %252 = vmatpush1.msra.mxu0 0.0
    %253 = vmatprep.subr.mxu0 0.0
    %254 = vmatpush1.msra.mxu0 0.0
    %255 = vmatprep.subr.mxu0 0.0
    %256 = vmatpush1.msra.mxu0 0.0
    %257 = vmatprep.subr.mxu0 0.0
    %258 = vmatpush1.msra.mxu0 0.0
    %259 = vmatprep.subr.mxu0 0.0
    %260 = vmatpush1.msra.mxu0 0.0
    %261 = vmatprep.subr.mxu0 0.0
    %262 = vmatpush1.msra.mxu0 0.0
    %263 = vmatprep.subr.mxu0 0.0
    %264 = vmatpush1.msra.mxu0 0.0
    %265 = vmatprep.subr.mxu0 0.0
    %266 = vmatpush1.msra.mxu0 0.0
    %267 = vmatprep.subr.mxu0 0.0
    %268 = vmatpush1.msra.mxu0 0.0
    %269 = vmatprep.subr.mxu0 0.0
    %270 = vmatpush1.msra.mxu0 0.0
    %271 = vmatprep.subr.mxu0 0.0
    %272 = vmatpush1.msra.mxu0 0.0
    %273 = vmatprep.subr.mxu0 0.0
    %274 = vmatpush1.msra.mxu0 0.0
    %275 = vmatprep.subr.mxu0 0.0
    %276 = vmatpush1.msra.mxu0 0.0
    %277 = vmatprep.subr.mxu0 0.0
    %278 = vmatpush1.msra.mxu0 0.0
    %279 = vmatprep.subr.mxu0 0.0
    %280 = vmatpush1.msra.mxu0 0.0
    %281 = vmatprep.subr.mxu0 0.0
    %282 = vmatpush1.msra.mxu0 0.0
    %283 = vmatprep.subr.mxu0 0.0
    %284 = vmatpush1.msra.mxu0 0.0
    %285 = vmatprep.subr.mxu0 0.0
    %286 = vmatpush1.msra.mxu0 0.0
    %287 = vmatprep.subr.mxu0 0.0
    %288 = vmatpush1.msra.mxu0 0.0
    %289 = vmatprep.subr.mxu0 0.0
    %290 = vmatpush1.msra.mxu0 0.0
    %291 = vmatprep.subr.mxu0 0.0
    %292 = vmatpush1.msra.mxu0 0.0
    %293 = vmatprep.subr.mxu0 0.0
    %294 = vmatpush1.msra.mxu0 0.0
    %295 = vmatprep.subr.mxu0 0.0
    %296 = vmatpush1.msra.mxu0 0.0
    %297 = vmatprep.mubr.f32.mxu0 0.0
    %298 = vmatmul.mubr.f32.gmra.mrb[0].mxu0 %v222
    %v299 = vpop.f32.mrb[0].mxu0
    %v300 = vadd.f32 0.0, %v299
    %v301 = vpop.f32.mrb[0].mxu0
    %302 = vmatprep.mubr.f32.mxu0 0.0
    %303 = vmatmul.mubr.f32.gmra.mrb[0].mxu0 %v225
    %v304 = vpop.f32.mrb[0].mxu0
    %v305 = vadd.f32 0.0, %v304
    %v306 = vpop.f32.mrb[0].mxu0
    %307 = vmatprep.mubr.f32.mxu0 0.0
    %308 = vmatmul.mubr.f32.gmra.mrb[0].mxu0 %v228
    %v309 = vpop.f32.mrb[0].mxu0
    %v310 = vadd.f32 0.0, %v309
    %v311 = vpop.f32.mrb[0].mxu0
    %312 = vmatprep.mubr.f32.mxu0 0.0
    %313 = vmatmul.mubr.f32.gmra.mrb[0].mxu0 %v231
    %v314 = vpop.f32.mrb[0].mxu0
    %v315 = vadd.f32 0.0, %v314
    %v316 = vpop.f32.mrb[0].mxu0
    %317 = vdwg.mxu0
    %v318 = vsel %vm51, %v300, 0.0
    %v319 = vsel %vm51, %v305, 0.0
    %v320 = vadd.f32 %v318, %v319
    %v321 = vsel %vm51, %v310, 0.0
    %v322 = vadd.f32 %v320, %v321
    %v323 = vsel %vm51, %v315, 0.0
    %v324 = vadd.f32 %v322, %v323
    %v325 = vrot.slane %v324, 4
    %v326 = vadd.f32 %v324, %v325
    %v327 = vrot.slane %v326, 2
    %v328 = vadd.f32 %v326, %v327
    %v329 = vrot.slane %v328, 1
    %v330 = vadd.f32 %v328, %v329
    %v331 = vmul.f32 %v330, 0.03125
    %v332 = vmul.f32 %v300, %v300
    %v333 = vmul.f32 %v305, %v305
    %v334 = vmul.f32 %v310, %v310
    %v335 = vmul.f32 %v315, %v315
    %v336 = vsel %vm51, %v332, 0.0
    %v337 = vsel %vm51, %v333, 0.0
    %v338 = vadd.f32 %v336, %v337
    %v339 = vsel %vm51, %v334, 0.0
    %v340 = vadd.f32 %v338, %v339
    %v341 = vsel %vm51, %v335, 0.0
    %v342 = vadd.f32 %v340, %v341
    %v343 = vrot.slane %v342, 4
    %v344 = vadd.f32 %v342, %v343
    %v345 = vrot.slane %v344, 2
    %v346 = vadd.f32 %v344, %v345
    %v347 = vrot.slane %v346, 1
    %v348 = vadd.f32 %v346, %v347
    %v349 = vmul.f32 %v348, 0.03125
    %v350 = vsub.f32 %v300, %v331
    %v351 = vsub.f32 %v305, %v331
    %v352 = vsub.f32 %v310, %v331
    %v353 = vsub.f32 %v315, %v331
    %v354 = vmul.f32 %v331, %v331
    %v355 = vsub.f32 %v349, %v354
    %v356 = vadd.f32 %v355, 0.001
    %v357 = vrsqrt.pop %v356
    %v358 = vmul.f32 %v350, %v357
    %v359 = vmul.f32 %v351, %v357
    %v360 = vmul.f32 %v352, %v357
    %v361 = vmul.f32 %v353, %v357
    %v362 = vld [vmem:[%s5] sm:$0x1]
    %v364 = vlaneseq
    %v365 = vshrl.u32 %v364, 7
    %v366 = vsub.s32 0, %v365
    %v367 = vrot.slane %v362, %v366
    %v369 = vmul.f32 %v358, %v367
    %v370 = vmul.f32 %v359, %v367
    %v371 = vmul.f32 %v360, %v367
    %v372 = vmul.f32 %v361, %v367
    %v373 = vld [vmem:[%s6] sm:$0x1]
    %v375 = vlaneseq
    %v376 = vshrl.u32 %v375, 7
    %v377 = vsub.s32 0, %v376
    %v378 = vrot.slane %v373, %v377
    %v380 = vadd.f32 %v369, %v378
    %v381 = vadd.f32 %v370, %v378
    %v382 = vadd.f32 %v371, %v378
    %v383 = vadd.f32 %v372, %v378
    %v384 = vmax.f32 %v380, 0.0
    %v385 = vmax.f32 %v381, 0.0
    %v386 = vmax.f32 %v382, 0.0
    %v387 = vmax.f32 %v383, 0.0
    %388 = vst.msk [vmem:[#allocation2] sm:$0xff] %vm51, %v384
    %389 = vst.msk [vmem:[#allocation2 + $0x8] sm:$0xff] %vm51, %v385
    %390 = vst.msk [vmem:[#allocation2 + $0x10] sm:$0xff] %vm51, %v386
    %391 = vst.msk [vmem:[#allocation2 + $0x18] sm:$0xff] %vm51, %v387
    %v392 = vld [vmem:[#allocation2] sm:$0x3]
    %v393 = vld [vmem:[%s7] sm:$0xff]
    %v394 = vld [vmem:[%s7 + $0x8] sm:$0xff]
    %v395 = vld [vmem:[#allocation2 + $0x2] sm:$0x3]
    %v396 = vld [vmem:[%s7 + $0x10] sm:$0xff]
    %v397 = vld [vmem:[%s7 + $0x18] sm:$0xff]
    %v399 = vsel %vm51, %v395, 0
    %401 = vmatprep.subr.mxu0 0.0
    %402 = vmatpush1.msra.mxu0 %v396
    %403 = vmatprep.subr.mxu0 0.0
    %404 = vmatpush1.msra.mxu0 %v397
    %405 = vmatprep.subr.mxu0 0.0
    %406 = vmatpush1.msra.mxu0 0.0
    %407 = vmatprep.subr.mxu0 0.0
    %408 = vmatpush1.msra.mxu0 0.0
    %409 = vmatprep.subr.mxu0 0.0
    %410 = vmatpush1.msra.mxu0 0.0
    %411 = vmatprep.subr.mxu0 0.0
    %412 = vmatpush1.msra.mxu0 0.0
    %413 = vmatprep.subr.mxu0 0.0
    %414 = vmatpush1.msra.mxu0 0.0
    %415 = vmatprep.subr.mxu0 0.0
    %416 = vmatpush1.msra.mxu0 0.0
    %417 = vmatprep.subr.mxu0 0.0
    %418 = vmatpush1.msra.mxu0 0.0
    %419 = vmatprep.subr.mxu0 0.0
    %420 = vmatpush1.msra.mxu0 0.0
    %421 = vmatprep.subr.mxu0 0.0
    %422 = vmatpush1.msra.mxu0 0.0
    %423 = vmatprep.subr.mxu0 0.0
    %424 = vmatpush1.msra.mxu0 0.0
    %425 = vmatprep.subr.mxu0 0.0
    %426 = vmatpush1.msra.mxu0 0.0
    %427 = vmatprep.subr.mxu0 0.0
    %428 = vmatpush1.msra.mxu0 0.0
    %429 = vmatprep.subr.mxu0 0.0
    %430 = vmatpush1.msra.mxu0 0.0
    %431 = vmatprep.subr.mxu0 0.0
    %432 = vmatpush1.msra.mxu0 0.0
    %433 = vmatprep.subr.mxu0 0.0
    %434 = vmatpush1.msra.mxu0 0.0
    %435 = vmatprep.subr.mxu0 0.0
    %436 = vmatpush1.msra.mxu0 0.0
    %437 = vmatprep.subr.mxu0 0.0
    %438 = vmatpush1.msra.mxu0 0.0
    %439 = vmatprep.subr.mxu0 0.0
    %440 = vmatpush1.msra.mxu0 0.0
    %441 = vmatprep.subr.mxu0 0.0
    %442 = vmatpush1.msra.mxu0 0.0
    %443 = vmatprep.subr.mxu0 0.0
    %444 = vmatpush1.msra.mxu0 0.0
    %445 = vmatprep.subr.mxu0 0.0
    %446 = vmatpush1.msra.mxu0 0.0
    %447 = vmatprep.subr.mxu0 0.0
    %448 = vmatpush1.msra.mxu0 0.0
    %449 = vmatprep.subr.mxu0 0.0
    %450 = vmatpush1.msra.mxu0 0.0
    %451 = vmatprep.subr.mxu0 0.0
    %452 = vmatpush1.msra.mxu0 0.0
    %453 = vmatprep.subr.mxu0 0.0
    %454 = vmatpush1.msra.mxu0 0.0
    %455 = vmatprep.subr.mxu0 0.0
    %456 = vmatpush1.msra.mxu0 0.0
    %457 = vmatprep.subr.mxu0 0.0
    %458 = vmatpush1.msra.mxu0 0.0
    %459 = vmatprep.subr.mxu0 0.0
    %460 = vmatpush1.msra.mxu0 0.0
    %461 = vmatprep.subr.mxu0 0.0
    %462 = vmatpush1.msra.mxu0 0.0
    %463 = vmatprep.subr.mxu0 0.0
    %464 = vmatpush1.msra.mxu0 0.0
    %465 = vmatprep.mubr.f32.mxu0 0.0
    %466 = vmatmul.mubr.f32.gmra.mrb[0].mxu0 %v399
    %v467 = vpop.f32.mrb[0].mxu0
    %v468 = vadd.f32 0.0, %v467
    %v469 = vpop.f32.mrb[0].mxu0
    %470 = vdwg.mxu0
    %v472 = vsel %vm51, %v392, 0
    %474 = vmatprep.subr.mxu0 0.0
    %475 = vmatpush1.msra.mxu0 %v393
    %476 = vmatprep.subr.mxu0 0.0
    %477 = vmatpush1.msra.mxu0 %v394
    %478 = vmatprep.subr.mxu0 0.0
    %479 = vmatpush1.msra.mxu0 0.0
    %480 = vmatprep.subr.mxu0 0.0
    %481 = vmatpush1.msra.mxu0 0.0
    %482 = vmatprep.subr.mxu0 0.0
    %483 = vmatpush1.msra.mxu0 0.0
    %484 = vmatprep.subr.mxu0 0.0
    %485 = vmatpush1.msra.mxu0 0.0
    %486 = vmatprep.subr.mxu0 0.0
    %487 = vmatpush1.msra.mxu0 0.0
    %488 = vmatprep.subr.mxu0 0.0
    %489 = vmatpush1.msra.mxu0 0.0
    %490 = vmatprep.subr.mxu0 0.0
    %491 = vmatpush1.msra.mxu0 0.0
    %492 = vmatprep.subr.mxu0 0.0
    %493 = vmatpush1.msra.mxu0 0.0
    %494 = vmatprep.subr.mxu0 0.0
    %495 = vmatpush1.msra.mxu0 0.0
    %496 = vmatprep.subr.mxu0 0.0
    %497 = vmatpush1.msra.mxu0 0.0
    %498 = vmatprep.subr.mxu0 0.0
    %499 = vmatpush1.msra.mxu0 0.0
    %500 = vmatprep.subr.mxu0 0.0
    %501 = vmatpush1.msra.mxu0 0.0
    %502 = vmatprep.subr.mxu0 0.0
    %503 = vmatpush1.msra.mxu0 0.0
    %504 = vmatprep.subr.mxu0 0.0
    %505 = vmatpush1.msra.mxu0 0.0
    %506 = vmatprep.subr.mxu0 0.0
    %507 = vmatpush1.msra.mxu0 0.0
    %508 = vmatprep.subr.mxu0 0.0
    %509 = vmatpush1.msra.mxu0 0.0
    %510 = vmatprep.subr.mxu0 0.0
    %511 = vmatpush1.msra.mxu0 0.0
    %512 = vmatprep.subr.mxu0 0.0
    %513 = vmatpush1.msra.mxu0 0.0
    %514 = vmatprep.subr.mxu0 0.0
    %515 = vmatpush1.msra.mxu0 0.0
    %516 = vmatprep.subr.mxu0 0.0
    %517 = vmatpush1.msra.mxu0 0.0
    %518 = vmatprep.subr.mxu0 0.0
    %519 = vmatpush1.msra.mxu0 0.0
    %520 = vmatprep.subr.mxu0 0.0
    %521 = vmatpush1.msra.mxu0 0.0
    %522 = vmatprep.subr.mxu0 0.0
    %523 = vmatpush1.msra.mxu0 0.0
    %524 = vmatprep.subr.mxu0 0.0
    %525 = vmatpush1.msra.mxu0 0.0
    %526 = vmatprep.subr.mxu0 0.0
    %527 = vmatpush1.msra.mxu0 0.0
    %528 = vmatprep.subr.mxu0 0.0
    %529 = vmatpush1.msra.mxu0 0.0
    %530 = vmatprep.subr.mxu0 0.0
    %531 = vmatpush1.msra.mxu0 0.0
    %532 = vmatprep.subr.mxu0 0.0
    %533 = vmatpush1.msra.mxu0 0.0
    %534 = vmatprep.subr.mxu0 0.0
    %535 = vmatpush1.msra.mxu0 0.0
    %536 = vmatprep.subr.mxu0 0.0
    %537 = vmatpush1.msra.mxu0 0.0
    %538 = vmatprep.mubr.f32.mxu0 0.0
    %539 = vmatmul.mubr.f32.gmra.mrb[0].mxu0 %v472
    %v540 = vpop.f32.mrb[0].mxu0
    %v541 = vadd.f32 %v468, %v540
    %v542 = vpop.f32.mrb[0].mxu0
    %543 = vdwg.mxu0
    %v544 = vld [vmem:[#allocation2 + $0x4] sm:$0x3]
    %v545 = vld [vmem:[%s7 + $0x20] sm:$0xff]
    %v546 = vld [vmem:[%s7 + $0x28] sm:$0xff]
    %v548 = vsel %vm51, %v544, 0
    %550 = vmatprep.subr.mxu0 0.0
    %551 = vmatpush1.msra.mxu0 %v545
    %552 = vmatprep.subr.mxu0 0.0
    %553 = vmatpush1.msra.mxu0 %v546
    %554 = vmatprep.subr.mxu0 0.0
    %555 = vmatpush1.msra.mxu0 0.0
    %556 = vmatprep.subr.mxu0 0.0
    %557 = vmatpush1.msra.mxu0 0.0
    %558 = vmatprep.subr.mxu0 0.0
    %559 = vmatpush1.msra.mxu0 0.0
    %560 = vmatprep.subr.mxu0 0.0
    %561 = vmatpush1.msra.mxu0 0.0
    %562 = vmatprep.subr.mxu0 0.0
    %563 = vmatpush1.msra.mxu0 0.0
    %564 = vmatprep.subr.mxu0 0.0
    %565 = vmatpush1.msra.mxu0 0.0
    %566 = vmatprep.subr.mxu0 0.0
    %567 = vmatpush1.msra.mxu0 0.0
    %568 = vmatprep.subr.mxu0 0.0
    %569 = vmatpush1.msra.mxu0 0.0
    %570 = vmatprep.subr.mxu0 0.0
    %571 = vmatpush1.msra.mxu0 0.0
    %572 = vmatprep.subr.mxu0 0.0
    %573 = vmatpush1.msra.mxu0 0.0
    %574 = vmatprep.subr.mxu0 0.0
    %575 = vmatpush1.msra.mxu0 0.0
    %576 = vmatprep.subr.mxu0 0.0
    %577 = vmatpush1.msra.mxu0 0.0
    %578 = vmatprep.subr.mxu0 0.0
    %579 = vmatpush1.msra.mxu0 0.0
    %580 = vmatprep.subr.mxu0 0.0
    %581 = vmatpush1.msra.mxu0 0.0
    %582 = vmatprep.subr.mxu0 0.0
    %583 = vmatpush1.msra.mxu0 0.0
    %584 = vmatprep.subr.mxu0 0.0
    %585 = vmatpush1.msra.mxu0 0.0
    %586 = vmatprep.subr.mxu0 0.0
    %587 = vmatpush1.msra.mxu0 0.0
    %588 = vmatprep.subr.mxu0 0.0
    %589 = vmatpush1.msra.mxu0 0.0
    %590 = vmatprep.subr.mxu0 0.0
    %591 = vmatpush1.msra.mxu0 0.0
    %592 = vmatprep.subr.mxu0 0.0
    %593 = vmatpush1.msra.mxu0 0.0
    %594 = vmatprep.subr.mxu0 0.0
    %595 = vmatpush1.msra.mxu0 0.0
    %596 = vmatprep.subr.mxu0 0.0
    %597 = vmatpush1.msra.mxu0 0.0
    %598 = vmatprep.subr.mxu0 0.0
    %599 = vmatpush1.msra.mxu0 0.0
    %600 = vmatprep.subr.mxu0 0.0
    %601 = vmatpush1.msra.mxu0 0.0
    %602 = vmatprep.subr.mxu0 0.0
    %603 = vmatpush1.msra.mxu0 0.0
    %604 = vmatprep.subr.mxu0 0.0
    %605 = vmatpush1.msra.mxu0 0.0
    %606 = vmatprep.subr.mxu0 0.0
    %607 = vmatpush1.msra.mxu0 0.0
    %608 = vmatprep.subr.mxu0 0.0
    %609 = vmatpush1.msra.mxu0 0.0
    %610 = vmatprep.subr.mxu0 0.0
    %611 = vmatpush1.msra.mxu0 0.0
    %612 = vmatprep.subr.mxu0 0.0
    %613 = vmatpush1.msra.mxu0 0.0
    %614 = vmatprep.mubr.f32.mxu0 0.0
    %615 = vmatmul.mubr.f32.gmra.mrb[0].mxu0 %v548
    %v616 = vpop.f32.mrb[0].mxu0
    %v617 = vadd.f32 0.0, %v616
    %v618 = vpop.f32.mrb[0].mxu0
    %619 = vdwg.mxu0
    %v620 = vadd.f32 %v541, %v617
    %v621 = vld [vmem:[#allocation2 + $0x6] sm:$0x3]
    %v622 = vld [vmem:[%s7 + $0x30] sm:$0xff]
    %v623 = vld [vmem:[%s7 + $0x38] sm:$0xff]
    %v625 = vsel %vm51, %v621, 0
    %627 = vmatprep.subr.mxu0 0.0
    %628 = vmatpush1.msra.mxu0 %v622
    %629 = vmatprep.subr.mxu0 0.0
    %630 = vmatpush1.msra.mxu0 %v623
    %631 = vmatprep.subr.mxu0 0.0
    %632 = vmatpush1.msra.mxu0 0.0
    %633 = vmatprep.subr.mxu0 0.0
    %634 = vmatpush1.msra.mxu0 0.0
    %635 = vmatprep.subr.mxu0 0.0
    %636 = vmatpush1.msra.mxu0 0.0
    %637 = vmatprep.subr.mxu0 0.0
    %638 = vmatpush1.msra.mxu0 0.0
    %639 = vmatprep.subr.mxu0 0.0
    %640 = vmatpush1.msra.mxu0 0.0
    %641 = vmatprep.subr.mxu0 0.0
    %642 = vmatpush1.msra.mxu0 0.0
    %643 = vmatprep.subr.mxu0 0.0
    %644 = vmatpush1.msra.mxu0 0.0
    %645 = vmatprep.subr.mxu0 0.0
    %646 = vmatpush1.msra.mxu0 0.0
    %647 = vmatprep.subr.mxu0 0.0
    %648 = vmatpush1.msra.mxu0 0.0
    %649 = vmatprep.subr.mxu0 0.0
    %650 = vmatpush1.msra.mxu0 0.0
    %651 = vmatprep.subr.mxu0 0.0
    %652 = vmatpush1.msra.mxu0 0.0
    %653 = vmatprep.subr.mxu0 0.0
    %654 = vmatpush1.msra.mxu0 0.0
    %655 = vmatprep.subr.mxu0 0.0
    %656 = vmatpush1.msra.mxu0 0.0
    %657 = vmatprep.subr.mxu0 0.0
    %658 = vmatpush1.msra.mxu0 0.0
    %659 = vmatprep.subr.mxu0 0.0
    %660 = vmatpush1.msra.mxu0 0.0
    %661 = vmatprep.subr.mxu0 0.0
    %662 = vmatpush1.msra.mxu0 0.0
    %663 = vmatprep.subr.mxu0 0.0
    %664 = vmatpush1.msra.mxu0 0.0
    %665 = vmatprep.subr.mxu0 0.0
    %666 = vmatpush1.msra.mxu0 0.0
    %667 = vmatprep.subr.mxu0 0.0
    %668 = vmatpush1.msra.mxu0 0.0
    %669 = vmatprep.subr.mxu0 0.0
    %670 = vmatpush1.msra.mxu0 0.0
    %671 = vmatprep.subr.mxu0 0.0
    %672 = vmatpush1.msra.mxu0 0.0
    %673 = vmatprep.subr.mxu0 0.0
    %674 = vmatpush1.msra.mxu0 0.0
    %675 = vmatprep.subr.mxu0 0.0
    %676 = vmatpush1.msra.mxu0 0.0
    %677 = vmatprep.subr.mxu0 0.0
    %678 = vmatpush1.msra.mxu0 0.0
    %679 = vmatprep.subr.mxu0 0.0
    %680 = vmatpush1.msra.mxu0 0.0
    %681 = vmatprep.subr.mxu0 0.0
    %682 = vmatpush1.msra.mxu0 0.0
    %683 = vmatprep.subr.mxu0 0.0
    %684 = vmatpush1.msra.mxu0 0.0
    %685 = vmatprep.subr.mxu0 0.0
    %686 = vmatpush1.msra.mxu0 0.0
    %687 = vmatprep.subr.mxu0 0.0
    %688 = vmatpush1.msra.mxu0 0.0
    %689 = vmatprep.subr.mxu0 0.0
    %690 = vmatpush1.msra.mxu0 0.0
    %691 = vmatprep.mubr.f32.mxu0 0.0
    %692 = vmatmul.mubr.f32.gmra.mrb[0].mxu0 %v625
    %v693 = vpop.f32.mrb[0].mxu0
    %v694 = vadd.f32 0.0, %v693
    %v695 = vpop.f32.mrb[0].mxu0
    %696 = vdwg.mxu0
    %v697 = vadd.f32 %v620, %v694
    %v698 = vld [vmem:[#allocation2 + $0x8] sm:$0x3]
    %v699 = vld [vmem:[%s7 + $0x40] sm:$0xff]
    %v700 = vld [vmem:[%s7 + $0x48] sm:$0xff]
    %v702 = vsel %vm51, %v698, 0
    %704 = vmatprep.subr.mxu0 0.0
    %705 = vmatpush1.msra.mxu0 %v699
    %706 = vmatprep.subr.mxu0 0.0
    %707 = vmatpush1.msra.mxu0 %v700
    %708 = vmatprep.subr.mxu0 0.0
    %709 = vmatpush1.msra.mxu0 0.0
    %710 = vmatprep.subr.mxu0 0.0
    %711 = vmatpush1.msra.mxu0 0.0
    %712 = vmatprep.subr.mxu0 0.0
    %713 = vmatpush1.msra.mxu0 0.0
    %714 = vmatprep.subr.mxu0 0.0
    %715 = vmatpush1.msra.mxu0 0.0
    %716 = vmatprep.subr.mxu0 0.0
    %717 = vmatpush1.msra.mxu0 0.0
    %718 = vmatprep.subr.mxu0 0.0
    %719 = vmatpush1.msra.mxu0 0.0
    %720 = vmatprep.subr.mxu0 0.0
    %721 = vmatpush1.msra.mxu0 0.0
    %722 = vmatprep.subr.mxu0 0.0
    %723 = vmatpush1.msra.mxu0 0.0
    %724 = vmatprep.subr.mxu0 0.0
    %725 = vmatpush1.msra.mxu0 0.0
    %726 = vmatprep.subr.mxu0 0.0
    %727 = vmatpush1.msra.mxu0 0.0
    %728 = vmatprep.subr.mxu0 0.0
    %729 = vmatpush1.msra.mxu0 0.0
    %730 = vmatprep.subr.mxu0 0.0
    %731 = vmatpush1.msra.mxu0 0.0
    %732 = vmatprep.subr.mxu0 0.0
    %733 = vmatpush1.msra.mxu0 0.0
    %734 = vmatprep.subr.mxu0 0.0
    %735 = vmatpush1.msra.mxu0 0.0
    %736 = vmatprep.subr.mxu0 0.0
    %737 = vmatpush1.msra.mxu0 0.0
    %738 = vmatprep.subr.mxu0 0.0
    %739 = vmatpush1.msra.mxu0 0.0
    %740 = vmatprep.subr.mxu0 0.0
    %741 = vmatpush1.msra.mxu0 0.0
    %742 = vmatprep.subr.mxu0 0.0
    %743 = vmatpush1.msra.mxu0 0.0
    %744 = vmatprep.subr.mxu0 0.0
    %745 = vmatpush1.msra.mxu0 0.0
    %746 = vmatprep.subr.mxu0 0.0
    %747 = vmatpush1.msra.mxu0 0.0
    %748 = vmatprep.subr.mxu0 0.0
    %749 = vmatpush1.msra.mxu0 0.0
    %750 = vmatprep.subr.mxu0 0.0
    %751 = vmatpush1.msra.mxu0 0.0
    %752 = vmatprep.subr.mxu0 0.0
    %753 = vmatpush1.msra.mxu0 0.0
    %754 = vmatprep.subr.mxu0 0.0
    %755 = vmatpush1.msra.mxu0 0.0
    %756 = vmatprep.subr.mxu0 0.0
    %757 = vmatpush1.msra.mxu0 0.0
    %758 = vmatprep.subr.mxu0 0.0
    %759 = vmatpush1.msra.mxu0 0.0
    %760 = vmatprep.subr.mxu0 0.0
    %761 = vmatpush1.msra.mxu0 0.0
    %762 = vmatprep.subr.mxu0 0.0
    %763 = vmatpush1.msra.mxu0 0.0
    %764 = vmatprep.subr.mxu0 0.0
    %765 = vmatpush1.msra.mxu0 0.0
    %766 = vmatprep.subr.mxu0 0.0
    %767 = vmatpush1.msra.mxu0 0.0
    %768 = vmatprep.mubr.f32.mxu0 0.0
    %769 = vmatmul.mubr.f32.gmra.mrb[0].mxu0 %v702
    %v770 = vpop.f32.mrb[0].mxu0
    %v771 = vadd.f32 0.0, %v770
    %v772 = vpop.f32.mrb[0].mxu0
    %773 = vdwg.mxu0
    %v774 = vadd.f32 %v697, %v771
    %v775 = vld [vmem:[#allocation2 + $0xa] sm:$0x3]
    %v776 = vld [vmem:[%s7 + $0x50] sm:$0xff]
    %v777 = vld [vmem:[%s7 + $0x58] sm:$0xff]
    %v779 = vsel %vm51, %v775, 0
    %781 = vmatprep.subr.mxu0 0.0
    %782 = vmatpush1.msra.mxu0 %v776
    %783 = vmatprep.subr.mxu0 0.0
    %784 = vmatpush1.msra.mxu0 %v777
    %785 = vmatprep.subr.mxu0 0.0
    %786 = vmatpush1.msra.mxu0 0.0
    %787 = vmatprep.subr.mxu0 0.0
    %788 = vmatpush1.msra.mxu0 0.0
    %789 = vmatprep.subr.mxu0 0.0
    %790 = vmatpush1.msra.mxu0 0.0
    %791 = vmatprep.subr.mxu0 0.0
    %792 = vmatpush1.msra.mxu0 0.0
    %793 = vmatprep.subr.mxu0 0.0
    %794 = vmatpush1.msra.mxu0 0.0
    %795 = vmatprep.subr.mxu0 0.0
    %796 = vmatpush1.msra.mxu0 0.0
    %797 = vmatprep.subr.mxu0 0.0
    %798 = vmatpush1.msra.mxu0 0.0
    %799 = vmatprep.subr.mxu0 0.0
    %800 = vmatpush1.msra.mxu0 0.0
    %801 = vmatprep.subr.mxu0 0.0
    %802 = vmatpush1.msra.mxu0 0.0
    %803 = vmatprep.subr.mxu0 0.0
    %804 = vmatpush1.msra.mxu0 0.0
    %805 = vmatprep.subr.mxu0 0.0
    %806 = vmatpush1.msra.mxu0 0.0
    %807 = vmatprep.subr.mxu0 0.0
    %808 = vmatpush1.msra.mxu0 0.0
    %809 = vmatprep.subr.mxu0 0.0
    %810 = vmatpush1.msra.mxu0 0.0
    %811 = vmatprep.subr.mxu0 0.0
    %812 = vmatpush1.msra.mxu0 0.0
    %813 = vmatprep.subr.mxu0 0.0
    %814 = vmatpush1.msra.mxu0 0.0
    %815 = vmatprep.subr.mxu0 0.0
    %816 = vmatpush1.msra.mxu0 0.0
    %817 = vmatprep.subr.mxu0 0.0
    %818 = vmatpush1.msra.mxu0 0.0
    %819 = vmatprep.subr.mxu0 0.0
    %820 = vmatpush1.msra.mxu0 0.0
    %821 = vmatprep.subr.mxu0 0.0
    %822 = vmatpush1.msra.mxu0 0.0
    %823 = vmatprep.subr.mxu0 0.0
    %824 = vmatpush1.msra.mxu0 0.0
    %825 = vmatprep.subr.mxu0 0.0
    %826 = vmatpush1.msra.mxu0 0.0
    %827 = vmatprep.subr.mxu0 0.0
    %828 = vmatpush1.msra.mxu0 0.0
    %829 = vmatprep.subr.mxu0 0.0
    %830 = vmatpush1.msra.mxu0 0.0
    %831 = vmatprep.subr.mxu0 0.0
    %832 = vmatpush1.msra.mxu0 0.0
    %833 = vmatprep.subr.mxu0 0.0
    %834 = vmatpush1.msra.mxu0 0.0
    %835 = vmatprep.subr.mxu0 0.0
    %836 = vmatpush1.msra.mxu0 0.0
    %837 = vmatprep.subr.mxu0 0.0
    %838 = vmatpush1.msra.mxu0 0.0
    %839 = vmatprep.subr.mxu0 0.0
    %840 = vmatpush1.msra.mxu0 0.0
    %841 = vmatprep.subr.mxu0 0.0
    %842 = vmatpush1.msra.mxu0 0.0
    %843 = vmatprep.subr.mxu0 0.0
    %844 = vmatpush1.msra.mxu0 0.0
    %845 = vmatprep.mubr.f32.mxu0 0.0
    %846 = vmatmul.mubr.f32.gmra.mrb[0].mxu0 %v779
    %v847 = vpop.f32.mrb[0].mxu0
    %v848 = vadd.f32 0.0, %v847
    %v849 = vpop.f32.mrb[0].mxu0
    %850 = vdwg.mxu0
    %v851 = vadd.f32 %v774, %v848
    %v852 = vld [vmem:[#allocation2 + $0xc] sm:$0x3]
    %v853 = vld [vmem:[%s7 + $0x60] sm:$0xff]
    %v854 = vld [vmem:[%s7 + $0x68] sm:$0xff]
    %v856 = vsel %vm51, %v852, 0
    %858 = vmatprep.subr.mxu0 0.0
    %859 = vmatpush1.msra.mxu0 %v853
    %860 = vmatprep.subr.mxu0 0.0
    %861 = vmatpush1.msra.mxu0 %v854
    %862 = vmatprep.subr.mxu0 0.0
    %863 = vmatpush1.msra.mxu0 0.0
    %864 = vmatprep.subr.mxu0 0.0
    %865 = vmatpush1.msra.mxu0 0.0
    %866 = vmatprep.subr.mxu0 0.0
    %867 = vmatpush1.msra.mxu0 0.0
    %868 = vmatprep.subr.mxu0 0.0
    %869 = vmatpush1.msra.mxu0 0.0
    %870 = vmatprep.subr.mxu0 0.0
    %871 = vmatpush1.msra.mxu0 0.0
    %872 = vmatprep.subr.mxu0 0.0
    %873 = vmatpush1.msra.mxu0 0.0
    %874 = vmatprep.subr.mxu0 0.0
    %875 = vmatpush1.msra.mxu0 0.0
    %876 = vmatprep.subr.mxu0 0.0
    %877 = vmatpush1.msra.mxu0 0.0
    %878 = vmatprep.subr.mxu0 0.0
    %879 = vmatpush1.msra.mxu0 0.0
    %880 = vmatprep.subr.mxu0 0.0
    %881 = vmatpush1.msra.mxu0 0.0
    %882 = vmatprep.subr.mxu0 0.0
    %883 = vmatpush1.msra.mxu0 0.0
    %884 = vmatprep.subr.mxu0 0.0
    %885 = vmatpush1.msra.mxu0 0.0
    %886 = vmatprep.subr.mxu0 0.0
    %887 = vmatpush1.msra.mxu0 0.0
    %888 = vmatprep.subr.mxu0 0.0
    %889 = vmatpush1.msra.mxu0 0.0
    %890 = vmatprep.subr.mxu0 0.0
    %891 = vmatpush1.msra.mxu0 0.0
    %892 = vmatprep.subr.mxu0 0.0
    %893 = vmatpush1.msra.mxu0 0.0
    %894 = vmatprep.subr.mxu0 0.0
    %895 = vmatpush1.msra.mxu0 0.0
    %896 = vmatprep.subr.mxu0 0.0
    %897 = vmatpush1.msra.mxu0 0.0
    %898 = vmatprep.subr.mxu0 0.0
    %899 = vmatpush1.msra.mxu0 0.0
    %900 = vmatprep.subr.mxu0 0.0
    %901 = vmatpush1.msra.mxu0 0.0
    %902 = vmatprep.subr.mxu0 0.0
    %903 = vmatpush1.msra.mxu0 0.0
    %904 = vmatprep.subr.mxu0 0.0
    %905 = vmatpush1.msra.mxu0 0.0
    %906 = vmatprep.subr.mxu0 0.0
    %907 = vmatpush1.msra.mxu0 0.0
    %908 = vmatprep.subr.mxu0 0.0
    %909 = vmatpush1.msra.mxu0 0.0
    %910 = vmatprep.subr.mxu0 0.0
    %911 = vmatpush1.msra.mxu0 0.0
    %912 = vmatprep.subr.mxu0 0.0
    %913 = vmatpush1.msra.mxu0 0.0
    %914 = vmatprep.subr.mxu0 0.0
    %915 = vmatpush1.msra.mxu0 0.0
    %916 = vmatprep.subr.mxu0 0.0
    %917 = vmatpush1.msra.mxu0 0.0
    %918 = vmatprep.subr.mxu0 0.0
    %919 = vmatpush1.msra.mxu0 0.0
    %920 = vmatprep.subr.mxu0 0.0
    %921 = vmatpush1.msra.mxu0 0.0
    %922 = vmatprep.mubr.f32.mxu0 0.0
    %923 = vmatmul.mubr.f32.gmra.mrb[0].mxu0 %v856
    %v924 = vpop.f32.mrb[0].mxu0
    %v925 = vadd.f32 0.0, %v924
    %v926 = vpop.f32.mrb[0].mxu0
    %927 = vdwg.mxu0
    %v928 = vadd.f32 %v851, %v925
    %v929 = vld [vmem:[#allocation2 + $0xe] sm:$0x3]
    %v930 = vld [vmem:[%s7 + $0x70] sm:$0xff]
    %v931 = vld [vmem:[%s7 + $0x78] sm:$0xff]
    %v933 = vsel %vm51, %v929, 0
    %935 = vmatprep.subr.mxu0 0.0
    %936 = vmatpush1.msra.mxu0 %v930
    %937 = vmatprep.subr.mxu0 0.0
    %938 = vmatpush1.msra.mxu0 %v931
    %939 = vmatprep.subr.mxu0 0.0
    %940 = vmatpush1.msra.mxu0 0.0
    %941 = vmatprep.subr.mxu0 0.0
    %942 = vmatpush1.msra.mxu0 0.0
    %943 = vmatprep.subr.mxu0 0.0
    %944 = vmatpush1.msra.mxu0 0.0
    %945 = vmatprep.subr.mxu0 0.0
    %946 = vmatpush1.msra.mxu0 0.0
    %947 = vmatprep.subr.mxu0 0.0
    %948 = vmatpush1.msra.mxu0 0.0
    %949 = vmatprep.subr.mxu0 0.0
    %950 = vmatpush1.msra.mxu0 0.0
    %951 = vmatprep.subr.mxu0 0.0
    %952 = vmatpush1.msra.mxu0 0.0
    %953 = vmatprep.subr.mxu0 0.0
    %954 = vmatpush1.msra.mxu0 0.0
    %955 = vmatprep.subr.mxu0 0.0
    %956 = vmatpush1.msra.mxu0 0.0
    %957 = vmatprep.subr.mxu0 0.0
    %958 = vmatpush1.msra.mxu0 0.0
    %959 = vmatprep.subr.mxu0 0.0
    %960 = vmatpush1.msra.mxu0 0.0
    %961 = vmatprep.subr.mxu0 0.0
    %962 = vmatpush1.msra.mxu0 0.0
    %963 = vmatprep.subr.mxu0 0.0
    %964 = vmatpush1.msra.mxu0 0.0
    %965 = vmatprep.subr.mxu0 0.0
    %966 = vmatpush1.msra.mxu0 0.0
    %967 = vmatprep.subr.mxu0 0.0
    %968 = vmatpush1.msra.mxu0 0.0
    %969 = vmatprep.subr.mxu0 0.0
    %970 = vmatpush1.msra.mxu0 0.0
    %971 = vmatprep.subr.mxu0 0.0
    %972 = vmatpush1.msra.mxu0 0.0
    %973 = vmatprep.subr.mxu0 0.0
    %974 = vmatpush1.msra.mxu0 0.0
    %975 = vmatprep.subr.mxu0 0.0
    %976 = vmatpush1.msra.mxu0 0.0
    %977 = vmatprep.subr.mxu0 0.0
    %978 = vmatpush1.msra.mxu0 0.0
    %979 = vmatprep.subr.mxu0 0.0
    %980 = vmatpush1.msra.mxu0 0.0
    %981 = vmatprep.subr.mxu0 0.0
    %982 = vmatpush1.msra.mxu0 0.0
    %983 = vmatprep.subr.mxu0 0.0
    %984 = vmatpush1.msra.mxu0 0.0
    %985 = vmatprep.subr.mxu0 0.0
    %986 = vmatpush1.msra.mxu0 0.0
    %987 = vmatprep.subr.mxu0 0.0
    %988 = vmatpush1.msra.mxu0 0.0
    %989 = vmatprep.subr.mxu0 0.0
    %990 = vmatpush1.msra.mxu0 0.0
    %991 = vmatprep.subr.mxu0 0.0
    %992 = vmatpush1.msra.mxu0 0.0
    %993 = vmatprep.subr.mxu0 0.0
    %994 = vmatpush1.msra.mxu0 0.0
    %995 = vmatprep.subr.mxu0 0.0
    %996 = vmatpush1.msra.mxu0 0.0
    %997 = vmatprep.subr.mxu0 0.0
    %998 = vmatpush1.msra.mxu0 0.0
    %999 = vmatprep.mubr.f32.mxu0 0.0
    %1000 = vmatmul.mubr.f32.gmra.mrb[0].mxu0 %v933
    %v1001 = vpop.f32.mrb[0].mxu0
    %v1002 = vadd.f32 0.0, %v1001
    %v1003 = vpop.f32.mrb[0].mxu0
    %1004 = vdwg.mxu0
    %v1005 = vadd.f32 %v928, %v1002
    %v1006 = vld [vmem:[#allocation2 + $0x10] sm:$0x3]
    %v1007 = vld [vmem:[%s7 + $0x80] sm:$0xff]
    %v1008 = vld [vmem:[%s7 + $0x88] sm:$0xff]
    %v1010 = vsel %vm51, %v1006, 0
    %1012 = vmatprep.subr.mxu0 0.0
    %1013 = vmatpush1.msra.mxu0 %v1007
    %1014 = vmatprep.subr.mxu0 0.0
    %1015 = vmatpush1.msra.mxu0 %v1008
    %1016 = vmatprep.subr.mxu0 0.0
    %1017 = vmatpush1.msra.mxu0 0.0
    %1018 = vmatprep.subr.mxu0 0.0
    %1019 = vmatpush1.msra.mxu0 0.0
    %1020 = vmatprep.subr.mxu0 0.0
    %1021 = vmatpush1.msra.mxu0 0.0
    %1022 = vmatprep.subr.mxu0 0.0
    %1023 = vmatpush1.msra.mxu0 0.0
    %1024 = vmatprep.subr.mxu0 0.0
    %1025 = vmatpush1.msra.mxu0 0.0
    %1026 = vmatprep.subr.mxu0 0.0
    %1027 = vmatpush1.msra.mxu0 0.0
    %1028 = vmatprep.subr.mxu0 0.0
    %1029 = vmatpush1.msra.mxu0 0.0
    %1030 = vmatprep.subr.mxu0 0.0
    %1031 = vmatpush1.msra.mxu0 0.0
    %1032 = vmatprep.subr.mxu0 0.0
    %1033 = vmatpush1.msra.mxu0 0.0
    %1034 = vmatprep.subr.mxu0 0.0
    %1035 = vmatpush1.msra.mxu0 0.0
    %1036 = vmatprep.subr.mxu0 0.0
    %1037 = vmatpush1.msra.mxu0 0.0
    %1038 = vmatprep.subr.mxu0 0.0
    %1039 = vmatpush1.msra.mxu0 0.0
    %1040 = vmatprep.subr.mxu0 0.0
    %1041 = vmatpush1.msra.mxu0 0.0
    %1042 = vmatprep.subr.mxu0 0.0
    %1043 = vmatpush1.msra.mxu0 0.0
    %1044 = vmatprep.subr.mxu0 0.0
    %1045 = vmatpush1.msra.mxu0 0.0
    %1046 = vmatprep.subr.mxu0 0.0
    %1047 = vmatpush1.msra.mxu0 0.0
    %1048 = vmatprep.subr.mxu0 0.0
    %1049 = vmatpush1.msra.mxu0 0.0
    %1050 = vmatprep.subr.mxu0 0.0
    %1051 = vmatpush1.msra.mxu0 0.0
    %1052 = vmatprep.subr.mxu0 0.0
    %1053 = vmatpush1.msra.mxu0 0.0
    %1054 = vmatprep.subr.mxu0 0.0
    %1055 = vmatpush1.msra.mxu0 0.0
    %1056 = vmatprep.subr.mxu0 0.0
    %1057 = vmatpush1.msra.mxu0 0.0
    %1058 = vmatprep.subr.mxu0 0.0
    %1059 = vmatpush1.msra.mxu0 0.0
    %1060 = vmatprep.subr.mxu0 0.0
    %1061 = vmatpush1.msra.mxu0 0.0
    %1062 = vmatprep.subr.mxu0 0.0
    %1063 = vmatpush1.msra.mxu0 0.0
    %1064 = vmatprep.subr.mxu0 0.0
    %1065 = vmatpush1.msra.mxu0 0.0
    %1066 = vmatprep.subr.mxu0 0.0
    %1067 = vmatpush1.msra.mxu0 0.0
    %1068 = vmatprep.subr.mxu0 0.0
    %1069 = vmatpush1.msra.mxu0 0.0
    %1070 = vmatprep.subr.mxu0 0.0
    %1071 = vmatpush1.msra.mxu0 0.0
    %1072 = vmatprep.subr.mxu0 0.0
    %1073 = vmatpush1.msra.mxu0 0.0
    %1074 = vmatprep.subr.mxu0 0.0
    %1075 = vmatpush1.msra.mxu0 0.0
    %1076 = vmatprep.mubr.f32.mxu0 0.0
    %1077 = vmatmul.mubr.f32.gmra.mrb[0].mxu0 %v1010
    %v1078 = vpop.f32.mrb[0].mxu0
    %v1079 = vadd.f32 0.0, %v1078
    %v1080 = vpop.f32.mrb[0].mxu0
    %1081 = vdwg.mxu0
    %v1082 = vadd.f32 %v1005, %v1079
    %v1083 = vld [vmem:[#allocation2 + $0x12] sm:$0x3]
    %v1084 = vld [vmem:[%s7 + $0x90] sm:$0xff]
    %v1085 = vld [vmem:[%s7 + $0x98] sm:$0xff]
    %v1087 = vsel %vm51, %v1083, 0
    %1089 = vmatprep.subr.mxu0 0.0
    %1090 = vmatpush1.msra.mxu0 %v1084
    %1091 = vmatprep.subr.mxu0 0.0
    %1092 = vmatpush1.msra.mxu0 %v1085
    %1093 = vmatprep.subr.mxu0 0.0
    %1094 = vmatpush1.msra.mxu0 0.0
    %1095 = vmatprep.subr.mxu0 0.0
    %1096 = vmatpush1.msra.mxu0 0.0
    %1097 = vmatprep.subr.mxu0 0.0
    %1098 = vmatpush1.msra.mxu0 0.0
    %1099 = vmatprep.subr.mxu0 0.0
    %1100 = vmatpush1.msra.mxu0 0.0
    %1101 = vmatprep.subr.mxu0 0.0
    %1102 = vmatpush1.msra.mxu0 0.0
    %1103 = vmatprep.subr.mxu0 0.0
    %1104 = vmatpush1.msra.mxu0 0.0
    %1105 = vmatprep.subr.mxu0 0.0
    %1106 = vmatpush1.msra.mxu0 0.0
    %1107 = vmatprep.subr.mxu0 0.0
    %1108 = vmatpush1.msra.mxu0 0.0
    %1109 = vmatprep.subr.mxu0 0.0
    %1110 = vmatpush1.msra.mxu0 0.0
    %1111 = vmatprep.subr.mxu0 0.0
    %1112 = vmatpush1.msra.mxu0 0.0
    %1113 = vmatprep.subr.mxu0 0.0
    %1114 = vmatpush1.msra.mxu0 0.0
    %1115 = vmatprep.subr.mxu0 0.0
    %1116 = vmatpush1.msra.mxu0 0.0
    %1117 = vmatprep.subr.mxu0 0.0
    %1118 = vmatpush1.msra.mxu0 0.0
    %1119 = vmatprep.subr.mxu0 0.0
    %1120 = vmatpush1.msra.mxu0 0.0
    %1121 = vmatprep.subr.mxu0 0.0
    %1122 = vmatpush1.msra.mxu0 0.0
    %1123 = vmatprep.subr.mxu0 0.0
    %1124 = vmatpush1.msra.mxu0 0.0
    %1125 = vmatprep.subr.mxu0 0.0
    %1126 = vmatpush1.msra.mxu0 0.0
    %1127 = vmatprep.subr.mxu0 0.0
    %1128 = vmatpush1.msra.mxu0 0.0
    %1129 = vmatprep.subr.mxu0 0.0
    %1130 = vmatpush1.msra.mxu0 0.0
    %1131 = vmatprep.subr.mxu0 0.0
    %1132 = vmatpush1.msra.mxu0 0.0
    %1133 = vmatprep.subr.mxu0 0.0
    %1134 = vmatpush1.msra.mxu0 0.0
    %1135 = vmatprep.subr.mxu0 0.0
    %1136 = vmatpush1.msra.mxu0 0.0
    %1137 = vmatprep.subr.mxu0 0.0
    %1138 = vmatpush1.msra.mxu0 0.0
    %1139 = vmatprep.subr.mxu0 0.0
    %1140 = vmatpush1.msra.mxu0 0.0
    %1141 = vmatprep.subr.mxu0 0.0
    %1142 = vmatpush1.msra.mxu0 0.0
    %1143 = vmatprep.subr.mxu0 0.0
    %1144 = vmatpush1.msra.mxu0 0.0
    %1145 = vmatprep.subr.mxu0 0.0
    %1146 = vmatpush1.msra.mxu0 0.0
    %1147 = vmatprep.subr.mxu0 0.0
    %1148 = vmatpush1.msra.mxu0 0.0
    %1149 = vmatprep.subr.mxu0 0.0
    %1150 = vmatpush1.msra.mxu0 0.0
    %1151 = vmatprep.subr.mxu0 0.0
    %1152 = vmatpush1.msra.mxu0 0.0
    %1153 = vmatprep.mubr.f32.mxu0 0.0
    %1154 = vmatmul.mubr.f32.gmra.mrb[0].mxu0 %v1087
    %v1155 = vpop.f32.mrb[0].mxu0
    %v1156 = vadd.f32 0.0, %v1155
    %v1157 = vpop.f32.mrb[0].mxu0
    %1158 = vdwg.mxu0
    %v1159 = vadd.f32 %v1082, %v1156
    %v1160 = vld [vmem:[#allocation2 + $0x14] sm:$0x3]
    %v1161 = vld [vmem:[%s7 + $0xa0] sm:$0xff]
    %v1162 = vld [vmem:[%s7 + $0xa8] sm:$0xff]
    %v1164 = vsel %vm51, %v1160, 0
    %1166 = vmatprep.subr.mxu0 0.0
    %1167 = vmatpush1.msra.mxu0 %v1161
    %1168 = vmatprep.subr.mxu0 0.0
    %1169 = vmatpush1.msra.mxu0 %v1162
    %1170 = vmatprep.subr.mxu0 0.0
    %1171 = vmatpush1.msra.mxu0 0.0
    %1172 = vmatprep.subr.mxu0 0.0
    %1173 = vmatpush1.msra.mxu0 0.0
    %1174 = vmatprep.subr.mxu0 0.0
    %1175 = vmatpush1.msra.mxu0 0.0
    %1176 = vmatprep.subr.mxu0 0.0
    %1177 = vmatpush1.msra.mxu0 0.0
    %1178 = vmatprep.subr.mxu0 0.0
    %1179 = vmatpush1.msra.mxu0 0.0
    %1180 = vmatprep.subr.mxu0 0.0
    %1181 = vmatpush1.msra.mxu0 0.0
    %1182 = vmatprep.subr.mxu0 0.0
    %1183 = vmatpush1.msra.mxu0 0.0
    %1184 = vmatprep.subr.mxu0 0.0
    %1185 = vmatpush1.msra.mxu0 0.0
    %1186 = vmatprep.subr.mxu0 0.0
    %1187 = vmatpush1.msra.mxu0 0.0
    %1188 = vmatprep.subr.mxu0 0.0
    %1189 = vmatpush1.msra.mxu0 0.0
    %1190 = vmatprep.subr.mxu0 0.0
    %1191 = vmatpush1.msra.mxu0 0.0
    %1192 = vmatprep.subr.mxu0 0.0
    %1193 = vmatpush1.msra.mxu0 0.0
    %1194 = vmatprep.subr.mxu0 0.0
    %1195 = vmatpush1.msra.mxu0 0.0
    %1196 = vmatprep.subr.mxu0 0.0
    %1197 = vmatpush1.msra.mxu0 0.0
    %1198 = vmatprep.subr.mxu0 0.0
    %1199 = vmatpush1.msra.mxu0 0.0
    %1200 = vmatprep.subr.mxu0 0.0
    %1201 = vmatpush1.msra.mxu0 0.0
    %1202 = vmatprep.subr.mxu0 0.0
    %1203 = vmatpush1.msra.mxu0 0.0
    %1204 = vmatprep.subr.mxu0 0.0
    %1205 = vmatpush1.msra.mxu0 0.0
    %1206 = vmatprep.subr.mxu0 0.0
    %1207 = vmatpush1.msra.mxu0 0.0
    %1208 = vmatprep.subr.mxu0 0.0
    %1209 = vmatpush1.msra.mxu0 0.0
    %1210 = vmatprep.subr.mxu0 0.0
    %1211 = vmatpush1.msra.mxu0 0.0
    %1212 = vmatprep.subr.mxu0 0.0
    %1213 = vmatpush1.msra.mxu0 0.0
    %1214 = vmatprep.subr.mxu0 0.0
    %1215 = vmatpush1.msra.mxu0 0.0
    %1216 = vmatprep.subr.mxu0 0.0
    %1217 = vmatpush1.msra.mxu0 0.0
    %1218 = vmatprep.subr.mxu0 0.0
    %1219 = vmatpush1.msra.mxu0 0.0
    %1220 = vmatprep.subr.mxu0 0.0
    %1221 = vmatpush1.msra.mxu0 0.0
    %1222 = vmatprep.subr.mxu0 0.0
    %1223 = vmatpush1.msra.mxu0 0.0
    %1224 = vmatprep.subr.mxu0 0.0
    %1225 = vmatpush1.msra.mxu0 0.0
    %1226 = vmatprep.subr.mxu0 0.0
    %1227 = vmatpush1.msra.mxu0 0.0
    %1228 = vmatprep.subr.mxu0 0.0
    %1229 = vmatpush1.msra.mxu0 0.0
    %1230 = vmatprep.mubr.f32.mxu0 0.0
    %1231 = vmatmul.mubr.f32.gmra.mrb[0].mxu0 %v1164
    %v1232 = vpop.f32.mrb[0].mxu0
    %v1233 = vadd.f32 0.0, %v1232
    %v1234 = vpop.f32.mrb[0].mxu0
    %1235 = vdwg.mxu0
    %v1236 = vadd.f32 %v1159, %v1233
    %v1237 = vld [vmem:[#allocation2 + $0x16] sm:$0x3]
    %v1238 = vld [vmem:[%s7 + $0xb0] sm:$0xff]
    %v1239 = vld [vmem:[%s7 + $0xb8] sm:$0xff]
    %v1241 = vsel %vm51, %v1237, 0
    %1243 = vmatprep.subr.mxu0 0.0
    %1244 = vmatpush1.msra.mxu0 %v1238
    %1245 = vmatprep.subr.mxu0 0.0
    %1246 = vmatpush1.msra.mxu0 %v1239
    %1247 = vmatprep.subr.mxu0 0.0
    %1248 = vmatpush1.msra.mxu0 0.0
    %1249 = vmatprep.subr.mxu0 0.0
    %1250 = vmatpush1.msra.mxu0 0.0
    %1251 = vmatprep.subr.mxu0 0.0
    %1252 = vmatpush1.msra.mxu0 0.0
    %1253 = vmatprep.subr.mxu0 0.0
    %1254 = vmatpush1.msra.mxu0 0.0
    %1255 = vmatprep.subr.mxu0 0.0
    %1256 = vmatpush1.msra.mxu0 0.0
    %1257 = vmatprep.subr.mxu0 0.0
    %1258 = vmatpush1.msra.mxu0 0.0
    %1259 = vmatprep.subr.mxu0 0.0
    %1260 = vmatpush1.msra.mxu0 0.0
    %1261 = vmatprep.subr.mxu0 0.0
    %1262 = vmatpush1.msra.mxu0 0.0
    %1263 = vmatprep.subr.mxu0 0.0
    %1264 = vmatpush1.msra.mxu0 0.0
    %1265 = vmatprep.subr.mxu0 0.0
    %1266 = vmatpush1.msra.mxu0 0.0
    %1267 = vmatprep.subr.mxu0 0.0
    %1268 = vmatpush1.msra.mxu0 0.0
    %1269 = vmatprep.subr.mxu0 0.0
    %1270 = vmatpush1.msra.mxu0 0.0
    %1271 = vmatprep.subr.mxu0 0.0
    %1272 = vmatpush1.msra.mxu0 0.0
    %1273 = vmatprep.subr.mxu0 0.0
    %1274 = vmatpush1.msra.mxu0 0.0
    %1275 = vmatprep.subr.mxu0 0.0
    %1276 = vmatpush1.msra.mxu0 0.0
    %1277 = vmatprep.subr.mxu0 0.0
    %1278 = vmatpush1.msra.mxu0 0.0
    %1279 = vmatprep.subr.mxu0 0.0
    %1280 = vmatpush1.msra.mxu0 0.0
    %1281 = vmatprep.subr.mxu0 0.0
    %1282 = vmatpush1.msra.mxu0 0.0
    %1283 = vmatprep.subr.mxu0 0.0
    %1284 = vmatpush1.msra.mxu0 0.0
    %1285 = vmatprep.subr.mxu0 0.0
    %1286 = vmatpush1.msra.mxu0 0.0
    %1287 = vmatprep.subr.mxu0 0.0
    %1288 = vmatpush1.msra.mxu0 0.0
    %1289 = vmatprep.subr.mxu0 0.0
    %1290 = vmatpush1.msra.mxu0 0.0
    %1291 = vmatprep.subr.mxu0 0.0
    %1292 = vmatpush1.msra.mxu0 0.0
    %1293 = vmatprep.subr.mxu0 0.0
    %1294 = vmatpush1.msra.mxu0 0.0
    %1295 = vmatprep.subr.mxu0 0.0
    %1296 = vmatpush1.msra.mxu0 0.0
    %1297 = vmatprep.subr.mxu0 0.0
    %1298 = vmatpush1.msra.mxu0 0.0
    %1299 = vmatprep.subr.mxu0 0.0
    %1300 = vmatpush1.msra.mxu0 0.0
    %1301 = vmatprep.subr.mxu0 0.0
    %1302 = vmatpush1.msra.mxu0 0.0
    %1303 = vmatprep.subr.mxu0 0.0
    %1304 = vmatpush1.msra.mxu0 0.0
    %1305 = vmatprep.subr.mxu0 0.0
    %1306 = vmatpush1.msra.mxu0 0.0
    %1307 = vmatprep.mubr.f32.mxu0 0.0
    %1308 = vmatmul.mubr.f32.gmra.mrb[0].mxu0 %v1241
    %v1309 = vpop.f32.mrb[0].mxu0
    %v1310 = vadd.f32 0.0, %v1309
    %v1311 = vpop.f32.mrb[0].mxu0
    %1312 = vdwg.mxu0
    %v1313 = vadd.f32 %v1236, %v1310
    %v1314 = vld [vmem:[#allocation2 + $0x18] sm:$0x3]
    %v1315 = vld [vmem:[%s7 + $0xc0] sm:$0xff]
    %v1316 = vld [vmem:[%s7 + $0xc8] sm:$0xff]
    %v1318 = vsel %vm51, %v1314, 0
    %1320 = vmatprep.subr.mxu0 0.0
    %1321 = vmatpush1.msra.mxu0 %v1315
    %1322 = vmatprep.subr.mxu0 0.0
    %1323 = vmatpush1.msra.mxu0 %v1316
    %1324 = vmatprep.subr.mxu0 0.0
    %1325 = vmatpush1.msra.mxu0 0.0
    %1326 = vmatprep.subr.mxu0 0.0
    %1327 = vmatpush1.msra.mxu0 0.0
    %1328 = vmatprep.subr.mxu0 0.0
    %1329 = vmatpush1.msra.mxu0 0.0
    %1330 = vmatprep.subr.mxu0 0.0
    %1331 = vmatpush1.msra.mxu0 0.0
    %1332 = vmatprep.subr.mxu0 0.0
    %1333 = vmatpush1.msra.mxu0 0.0
    %1334 = vmatprep.subr.mxu0 0.0
    %1335 = vmatpush1.msra.mxu0 0.0
    %1336 = vmatprep.subr.mxu0 0.0
    %1337 = vmatpush1.msra.mxu0 0.0
    %1338 = vmatprep.subr.mxu0 0.0
    %1339 = vmatpush1.msra.mxu0 0.0
    %1340 = vmatprep.subr.mxu0 0.0
    %1341 = vmatpush1.msra.mxu0 0.0
    %1342 = vmatprep.subr.mxu0 0.0
    %1343 = vmatpush1.msra.mxu0 0.0
    %1344 = vmatprep.subr.mxu0 0.0
    %1345 = vmatpush1.msra.mxu0 0.0
    %1346 = vmatprep.subr.mxu0 0.0
    %1347 = vmatpush1.msra.mxu0 0.0
    %1348 = vmatprep.subr.mxu0 0.0
    %1349 = vmatpush1.msra.mxu0 0.0
    %1350 = vmatprep.subr.mxu0 0.0
    %1351 = vmatpush1.msra.mxu0 0.0
    %1352 = vmatprep.subr.mxu0 0.0
    %1353 = vmatpush1.msra.mxu0 0.0
    %1354 = vmatprep.subr.mxu0 0.0
    %1355 = vmatpush1.msra.mxu0 0.0
    %1356 = vmatprep.subr.mxu0 0.0
    %1357 = vmatpush1.msra.mxu0 0.0
    %1358 = vmatprep.subr.mxu0 0.0
    %1359 = vmatpush1.msra.mxu0 0.0
    %1360 = vmatprep.subr.mxu0 0.0
    %1361 = vmatpush1.msra.mxu0 0.0
    %1362 = vmatprep.subr.mxu0 0.0
    %1363 = vmatpush1.msra.mxu0 0.0
    %1364 = vmatprep.subr.mxu0 0.0
    %1365 = vmatpush1.msra.mxu0 0.0
    %1366 = vmatprep.subr.mxu0 0.0
    %1367 = vmatpush1.msra.mxu0 0.0
    %1368 = vmatprep.subr.mxu0 0.0
    %1369 = vmatpush1.msra.mxu0 0.0
    %1370 = vmatprep.subr.mxu0 0.0
    %1371 = vmatpush1.msra.mxu0 0.0
    %1372 = vmatprep.subr.mxu0 0.0
    %1373 = vmatpush1.msra.mxu0 0.0
    %1374 = vmatprep.subr.mxu0 0.0
    %1375 = vmatpush1.msra.mxu0 0.0
    %1376 = vmatprep.subr.mxu0 0.0
    %1377 = vmatpush1.msra.mxu0 0.0
    %1378 = vmatprep.subr.mxu0 0.0
    %1379 = vmatpush1.msra.mxu0 0.0
    %1380 = vmatprep.subr.mxu0 0.0
    %1381 = vmatpush1.msra.mxu0 0.0
    %1382 = vmatprep.subr.mxu0 0.0
    %1383 = vmatpush1.msra.mxu0 0.0
    %1384 = vmatprep.mubr.f32.mxu0 0.0
    %1385 = vmatmul.mubr.f32.gmra.mrb[0].mxu0 %v1318
    %v1386 = vpop.f32.mrb[0].mxu0
    %v1387 = vadd.f32 0.0, %v1386
    %v1388 = vpop.f32.mrb[0].mxu0
    %1389 = vdwg.mxu0
    %v1390 = vadd.f32 %v1313, %v1387
    %v1391 = vld [vmem:[#allocation2 + $0x1a] sm:$0x3]
    %v1392 = vld [vmem:[%s7 + $0xd0] sm:$0xff]
    %v1393 = vld [vmem:[%s7 + $0xd8] sm:$0xff]
    %v1395 = vsel %vm51, %v1391, 0
    %1397 = vmatprep.subr.mxu0 0.0
    %1398 = vmatpush1.msra.mxu0 %v1392
    %1399 = vmatprep.subr.mxu0 0.0
    %1400 = vmatpush1.msra.mxu0 %v1393
    %1401 = vmatprep.subr.mxu0 0.0
    %1402 = vmatpush1.msra.mxu0 0.0
    %1403 = vmatprep.subr.mxu0 0.0
    %1404 = vmatpush1.msra.mxu0 0.0
    %1405 = vmatprep.subr.mxu0 0.0
    %1406 = vmatpush1.msra.mxu0 0.0
    %1407 = vmatprep.subr.mxu0 0.0
    %1408 = vmatpush1.msra.mxu0 0.0
    %1409 = vmatprep.subr.mxu0 0.0
    %1410 = vmatpush1.msra.mxu0 0.0
    %1411 = vmatprep.subr.mxu0 0.0
    %1412 = vmatpush1.msra.mxu0 0.0
    %1413 = vmatprep.subr.mxu0 0.0
    %1414 = vmatpush1.msra.mxu0 0.0
    %1415 = vmatprep.subr.mxu0 0.0
    %1416 = vmatpush1.msra.mxu0 0.0
    %1417 = vmatprep.subr.mxu0 0.0
    %1418 = vmatpush1.msra.mxu0 0.0
    %1419 = vmatprep.subr.mxu0 0.0
    %1420 = vmatpush1.msra.mxu0 0.0
    %1421 = vmatprep.subr.mxu0 0.0
    %1422 = vmatpush1.msra.mxu0 0.0
    %1423 = vmatprep.subr.mxu0 0.0
    %1424 = vmatpush1.msra.mxu0 0.0
    %1425 = vmatprep.subr.mxu0 0.0
    %1426 = vmatpush1.msra.mxu0 0.0
    %1427 = vmatprep.subr.mxu0 0.0
    %1428 = vmatpush1.msra.mxu0 0.0
    %1429 = vmatprep.subr.mxu0 0.0
    %1430 = vmatpush1.msra.mxu0 0.0
    %1431 = vmatprep.subr.mxu0 0.0
    %1432 = vmatpush1.msra.mxu0 0.0
    %1433 = vmatprep.subr.mxu0 0.0
    %1434 = vmatpush1.msra.mxu0 0.0
    %1435 = vmatprep.subr.mxu0 0.0
    %1436 = vmatpush1.msra.mxu0 0.0
    %1437 = vmatprep.subr.mxu0 0.0
    %1438 = vmatpush1.msra.mxu0 0.0
    %1439 = vmatprep.subr.mxu0 0.0
    %1440 = vmatpush1.msra.mxu0 0.0
    %1441 = vmatprep.subr.mxu0 0.0
    %1442 = vmatpush1.msra.mxu0 0.0
    %1443 = vmatprep.subr.mxu0 0.0
    %1444 = vmatpush1.msra.mxu0 0.0
    %1445 = vmatprep.subr.mxu0 0.0
    %1446 = vmatpush1.msra.mxu0 0.0
    %1447 = vmatprep.subr.mxu0 0.0
    %1448 = vmatpush1.msra.mxu0 0.0
    %1449 = vmatprep.subr.mxu0 0.0
    %1450 = vmatpush1.msra.mxu0 0.0
    %1451 = vmatprep.subr.mxu0 0.0
    %1452 = vmatpush1.msra.mxu0 0.0
    %1453 = vmatprep.subr.mxu0 0.0
    %1454 = vmatpush1.msra.mxu0 0.0
    %1455 = vmatprep.subr.mxu0 0.0
    %1456 = vmatpush1.msra.mxu0 0.0
    %1457 = vmatprep.subr.mxu0 0.0
    %1458 = vmatpush1.msra.mxu0 0.0
    %1459 = vmatprep.subr.mxu0 0.0
    %1460 = vmatpush1.msra.mxu0 0.0
    %1461 = vmatprep.mubr.f32.mxu0 0.0
    %1462 = vmatmul.mubr.f32.gmra.mrb[0].mxu0 %v1395
    %v1463 = vpop.f32.mrb[0].mxu0
    %v1464 = vadd.f32 0.0, %v1463
    %v1465 = vpop.f32.mrb[0].mxu0
    %1466 = vdwg.mxu0
    %v1467 = vadd.f32 %v1390, %v1464
    %v1468 = vld [vmem:[#allocation2 + $0x1c] sm:$0x3]
    %v1469 = vld [vmem:[%s7 + $0xe0] sm:$0xff]
    %v1470 = vld [vmem:[%s7 + $0xe8] sm:$0xff]
    %v1472 = vsel %vm51, %v1468, 0
    %1474 = vmatprep.subr.mxu0 0.0
    %1475 = vmatpush1.msra.mxu0 %v1469
    %1476 = vmatprep.subr.mxu0 0.0
    %1477 = vmatpush1.msra.mxu0 %v1470
    %1478 = vmatprep.subr.mxu0 0.0
    %1479 = vmatpush1.msra.mxu0 0.0
    %1480 = vmatprep.subr.mxu0 0.0
    %1481 = vmatpush1.msra.mxu0 0.0
    %1482 = vmatprep.subr.mxu0 0.0
    %1483 = vmatpush1.msra.mxu0 0.0
    %1484 = vmatprep.subr.mxu0 0.0
    %1485 = vmatpush1.msra.mxu0 0.0
    %1486 = vmatprep.subr.mxu0 0.0
    %1487 = vmatpush1.msra.mxu0 0.0
    %1488 = vmatprep.subr.mxu0 0.0
    %1489 = vmatpush1.msra.mxu0 0.0
    %1490 = vmatprep.subr.mxu0 0.0
    %1491 = vmatpush1.msra.mxu0 0.0
    %1492 = vmatprep.subr.mxu0 0.0
    %1493 = vmatpush1.msra.mxu0 0.0
    %1494 = vmatprep.subr.mxu0 0.0
    %1495 = vmatpush1.msra.mxu0 0.0
    %1496 = vmatprep.subr.mxu0 0.0
    %1497 = vmatpush1.msra.mxu0 0.0
    %1498 = vmatprep.subr.mxu0 0.0
    %1499 = vmatpush1.msra.mxu0 0.0
    %1500 = vmatprep.subr.mxu0 0.0
    %1501 = vmatpush1.msra.mxu0 0.0
    %1502 = vmatprep.subr.mxu0 0.0
    %1503 = vmatpush1.msra.mxu0 0.0
    %1504 = vmatprep.subr.mxu0 0.0
    %1505 = vmatpush1.msra.mxu0 0.0
    %1506 = vmatprep.subr.mxu0 0.0
    %1507 = vmatpush1.msra.mxu0 0.0
    %1508 = vmatprep.subr.mxu0 0.0
    %1509 = vmatpush1.msra.mxu0 0.0
    %1510 = vmatprep.subr.mxu0 0.0
    %1511 = vmatpush1.msra.mxu0 0.0
    %1512 = vmatprep.subr.mxu0 0.0
    %1513 = vmatpush1.msra.mxu0 0.0
    %1514 = vmatprep.subr.mxu0 0.0
    %1515 = vmatpush1.msra.mxu0 0.0
    %1516 = vmatprep.subr.mxu0 0.0
    %1517 = vmatpush1.msra.mxu0 0.0
    %1518 = vmatprep.subr.mxu0 0.0
    %1519 = vmatpush1.msra.mxu0 0.0
    %1520 = vmatprep.subr.mxu0 0.0
    %1521 = vmatpush1.msra.mxu0 0.0
    %1522 = vmatprep.subr.mxu0 0.0
    %1523 = vmatpush1.msra.mxu0 0.0
    %1524 = vmatprep.subr.mxu0 0.0
    %1525 = vmatpush1.msra.mxu0 0.0
    %1526 = vmatprep.subr.mxu0 0.0
    %1527 = vmatpush1.msra.mxu0 0.0
    %1528 = vmatprep.subr.mxu0 0.0
    %1529 = vmatpush1.msra.mxu0 0.0
    %1530 = vmatprep.subr.mxu0 0.0
    %1531 = vmatpush1.msra.mxu0 0.0
    %1532 = vmatprep.subr.mxu0 0.0
    %1533 = vmatpush1.msra.mxu0 0.0
    %1534 = vmatprep.subr.mxu0 0.0
    %1535 = vmatpush1.msra.mxu0 0.0
    %1536 = vmatprep.subr.mxu0 0.0
    %1537 = vmatpush1.msra.mxu0 0.0
    %1538 = vmatprep.mubr.f32.mxu0 0.0
    %1539 = vmatmul.mubr.f32.gmra.mrb[0].mxu0 %v1472
    %v1540 = vpop.f32.mrb[0].mxu0
    %v1541 = vadd.f32 0.0, %v1540
    %v1542 = vpop.f32.mrb[0].mxu0
    %1543 = vdwg.mxu0
    %v1544 = vadd.f32 %v1467, %v1541
    %v1545 = vld [vmem:[#allocation2 + $0x1e] sm:$0x3]
    %v1546 = vld [vmem:[%s7 + $0xf0] sm:$0xff]
    %v1547 = vld [vmem:[%s7 + $0xf8] sm:$0xff]
    %v1549 = vsel %vm51, %v1545, 0
    %1551 = vmatprep.subr.mxu0 0.0
    %1552 = vmatpush1.msra.mxu0 %v1546
    %1553 = vmatprep.subr.mxu0 0.0
    %1554 = vmatpush1.msra.mxu0 %v1547
    %1555 = vmatprep.subr.mxu0 0.0
    %1556 = vmatpush1.msra.mxu0 0.0
    %1557 = vmatprep.subr.mxu0 0.0
    %1558 = vmatpush1.msra.mxu0 0.0
    %1559 = vmatprep.subr.mxu0 0.0
    %1560 = vmatpush1.msra.mxu0 0.0
    %1561 = vmatprep.subr.mxu0 0.0
    %1562 = vmatpush1.msra.mxu0 0.0
    %1563 = vmatprep.subr.mxu0 0.0
    %1564 = vmatpush1.msra.mxu0 0.0
    %1565 = vmatprep.subr.mxu0 0.0
    %1566 = vmatpush1.msra.mxu0 0.0
    %1567 = vmatprep.subr.mxu0 0.0
    %1568 = vmatpush1.msra.mxu0 0.0
    %1569 = vmatprep.subr.mxu0 0.0
    %1570 = vmatpush1.msra.mxu0 0.0
    %1571 = vmatprep.subr.mxu0 0.0
    %1572 = vmatpush1.msra.mxu0 0.0
    %1573 = vmatprep.subr.mxu0 0.0
    %1574 = vmatpush1.msra.mxu0 0.0
    %1575 = vmatprep.subr.mxu0 0.0
    %1576 = vmatpush1.msra.mxu0 0.0
    %1577 = vmatprep.subr.mxu0 0.0
    %1578 = vmatpush1.msra.mxu0 0.0
    %1579 = vmatprep.subr.mxu0 0.0
    %1580 = vmatpush1.msra.mxu0 0.0
    %1581 = vmatprep.subr.mxu0 0.0
    %1582 = vmatpush1.msra.mxu0 0.0
    %1583 = vmatprep.subr.mxu0 0.0
    %1584 = vmatpush1.msra.mxu0 0.0
    %1585 = vmatprep.subr.mxu0 0.0
    %1586 = vmatpush1.msra.mxu0 0.0
    %1587 = vmatprep.subr.mxu0 0.0
    %1588 = vmatpush1.msra.mxu0 0.0
    %1589 = vmatprep.subr.mxu0 0.0
    %1590 = vmatpush1.msra.mxu0 0.0
    %1591 = vmatprep.subr.mxu0 0.0
    %1592 = vmatpush1.msra.mxu0 0.0
    %1593 = vmatprep.subr.mxu0 0.0
    %1594 = vmatpush1.msra.mxu0 0.0
    %1595 = vmatprep.subr.mxu0 0.0
    %1596 = vmatpush1.msra.mxu0 0.0
    %1597 = vmatprep.subr.mxu0 0.0
    %1598 = vmatpush1.msra.mxu0 0.0
    %1599 = vmatprep.subr.mxu0 0.0
    %1600 = vmatpush1.msra.mxu0 0.0
    %1601 = vmatprep.subr.mxu0 0.0
    %1602 = vmatpush1.msra.mxu0 0.0
    %1603 = vmatprep.subr.mxu0 0.0
    %1604 = vmatpush1.msra.mxu0 0.0
    %1605 = vmatprep.subr.mxu0 0.0
    %1606 = vmatpush1.msra.mxu0 0.0
    %1607 = vmatprep.subr.mxu0 0.0
    %1608 = vmatpush1.msra.mxu0 0.0
    %1609 = vmatprep.subr.mxu0 0.0
    %1610 = vmatpush1.msra.mxu0 0.0
    %1611 = vmatprep.subr.mxu0 0.0
    %1612 = vmatpush1.msra.mxu0 0.0
    %1613 = vmatprep.subr.mxu0 0.0
    %1614 = vmatpush1.msra.mxu0 0.0
    %1615 = vmatprep.mubr.f32.mxu0 0.0
    %1616 = vmatmul.mubr.f32.gmra.mrb[0].mxu0 %v1549
    %v1617 = vpop.f32.mrb[0].mxu0
    %v1618 = vadd.f32 0.0, %v1617
    %v1619 = vpop.f32.mrb[0].mxu0
    %1620 = vdwg.mxu0
    %v1621 = vadd.f32 %v1544, %v1618
    %v1622 = vld [vmem:[%s8] sm:$0x1]
    %v1624 = vlaneseq
    %v1625 = vshrl.u32 %v1624, 7
    %v1626 = vsub.s32 0, %v1625
    %v1627 = vrot.slane %v1622, %v1626
    %v1629 = vadd.f32 %v1621, %v1627
    %v1630 = vmax.f32 %v1629, 0.0
    %v1631 = vld [vmem:[%s9] sm:$0xff]
    %v1632 = vld [vmem:[%s9 + $0x8] sm:$0xff]
    %v1633 = vld [vmem:[%s9 + $0x10] sm:$0xff]
    %v1634 = vld [vmem:[%s9 + $0x18] sm:$0xff]
    %v1635 = vld [vmem:[%s9 + $0x20] sm:$0xff]
    %v1636 = vld [vmem:[%s9 + $0x28] sm:$0xff]
    %v1637 = vld [vmem:[%s9 + $0x30] sm:$0xff]
    %v1638 = vld [vmem:[%s9 + $0x38] sm:$0xff]
    %v1639 = vld [vmem:[%s9 + $0x40] sm:$0xff]
    %v1640 = vld [vmem:[%s9 + $0x48] sm:$0xff]
    %v1641 = vld [vmem:[%s9 + $0x50] sm:$0xff]
    %v1642 = vld [vmem:[%s9 + $0x58] sm:$0xff]
    %v1643 = vld [vmem:[%s9 + $0x60] sm:$0xff]
    %v1644 = vld [vmem:[%s9 + $0x68] sm:$0xff]
    %v1645 = vld [vmem:[%s9 + $0x70] sm:$0xff]
    %v1646 = vld [vmem:[%s9 + $0x78] sm:$0xff]
    %v1647 = vld [vmem:[%s10] sm:$0x1]
    %v1649 = vlaneseq
    %v1650 = vshrl.u32 %v1649, 7
    %v1651 = vsub.s32 0, %v1650
    %v1652 = vrot.slane %v1647, %v1651
    %1654 = vmatprep.subr.mxu0 0.0
    %1655 = vmatpush1.msra.mxu0 %v1631
    %1656 = vmatprep.subr.mxu0 0.0
    %1657 = vmatpush1.msra.mxu0 %v1632
    %1658 = vmatprep.subr.mxu0 0.0
    %1659 = vmatpush1.msra.mxu0 %v1633
    %1660 = vmatprep.subr.mxu0 0.0
    %1661 = vmatpush1.msra.mxu0 %v1634
    %1662 = vmatprep.subr.mxu0 0.0
    %1663 = vmatpush1.msra.mxu0 %v1635
    %1664 = vmatprep.subr.mxu0 0.0
    %1665 = vmatpush1.msra.mxu0 %v1636
    %1666 = vmatprep.subr.mxu0 0.0
    %1667 = vmatpush1.msra.mxu0 %v1637
    %1668 = vmatprep.subr.mxu0 0.0
    %1669 = vmatpush1.msra.mxu0 %v1638
    %1670 = vmatprep.subr.mxu0 0.0
    %1671 = vmatpush1.msra.mxu0 %v1639
    %1672 = vmatprep.subr.mxu0 0.0
    %1673 = vmatpush1.msra.mxu0 %v1640
    %1674 = vmatprep.subr.mxu0 0.0
    %1675 = vmatpush1.msra.mxu0 %v1641
    %1676 = vmatprep.subr.mxu0 0.0
    %1677 = vmatpush1.msra.mxu0 %v1642
    %1678 = vmatprep.subr.mxu0 0.0
    %1679 = vmatpush1.msra.mxu0 %v1643
    %1680 = vmatprep.subr.mxu0 0.0
    %1681 = vmatpush1.msra.mxu0 %v1644
    %1682 = vmatprep.subr.mxu0 0.0
    %1683 = vmatpush1.msra.mxu0 %v1645
    %1684 = vmatprep.subr.mxu0 0.0
    %1685 = vmatpush1.msra.mxu0 %v1646
    %1686 = vmatprep.subr.mxu0 0.0
    %1687 = vmatpush1.msra.mxu0 0.0
    %1688 = vmatprep.subr.mxu0 0.0
    %1689 = vmatpush1.msra.mxu0 0.0
    %1690 = vmatprep.subr.mxu0 0.0
    %1691 = vmatpush1.msra.mxu0 0.0
    %1692 = vmatprep.subr.mxu0 0.0
    %1693 = vmatpush1.msra.mxu0 0.0
    %1694 = vmatprep.subr.mxu0 0.0
    %1695 = vmatpush1.msra.mxu0 0.0
    %1696 = vmatprep.subr.mxu0 0.0
    %1697 = vmatpush1.msra.mxu0 0.0
    %1698 = vmatprep.subr.mxu0 0.0
    %1699 = vmatpush1.msra.mxu0 0.0
    %1700 = vmatprep.subr.mxu0 0.0
    %1701 = vmatpush1.msra.mxu0 0.0
    %1702 = vmatprep.subr.mxu0 0.0
    %1703 = vmatpush1.msra.mxu0 0.0
    %1704 = vmatprep.subr.mxu0 0.0
    %1705 = vmatpush1.msra.mxu0 0.0
    %1706 = vmatprep.subr.mxu0 0.0
    %1707 = vmatpush1.msra.mxu0 0.0
    %1708 = vmatprep.subr.mxu0 0.0
    %1709 = vmatpush1.msra.mxu0 0.0
    %1710 = vmatprep.subr.mxu0 0.0
    %1711 = vmatpush1.msra.mxu0 0.0
    %1712 = vmatprep.subr.mxu0 0.0
    %1713 = vmatpush1.msra.mxu0 0.0
    %1714 = vmatprep.subr.mxu0 0.0
    %1715 = vmatpush1.msra.mxu0 0.0
    %1716 = vmatprep.subr.mxu0 0.0
    %1717 = vmatpush1.msra.mxu0 0.0
    %1718 = vmatprep.mubr.f32.mxu0 0.0
    %1719 = vmatmul.mubr.f32.gmra.mrb[0].mxu0 %v1630
    %v1720 = vpop.f32.mrb[0].mxu0
    %v1721 = vadd.f32 %v1652, %v1720
    %v1722 = vpop.f32.mrb[0].mxu0
    %1723 = vdwg.mxu0
    %v1724 = vmax.f32 %v1721, 0.0
    %v1725 = vld [vmem:[%s11] sm:$0xff]
    %v1726 = vld [vmem:[%s11 + $0x8] sm:$0xff]
    %v1727 = vld [vmem:[%s11 + $0x10] sm:$0xff]
    %v1728 = vld [vmem:[%s11 + $0x18] sm:$0xff]
    %v1729 = vld [vmem:[%s11 + $0x20] sm:$0xff]
    %v1730 = vld [vmem:[%s11 + $0x28] sm:$0xff]
    %v1731 = vld [vmem:[%s11 + $0x30] sm:$0xff]
    %v1732 = vld [vmem:[%s11 + $0x38] sm:$0xff]
    %v1733 = vld [vmem:[%s12] sm:$0x1]
    %v1735 = vlaneseq
    %v1736 = vshrl.u32 %v1735, 7
    %v1737 = vsub.s32 0, %v1736
    %v1738 = vrot.slane %v1733, %v1737
    %vm1740 = vcmask 523264
    %v1742 = vsel %vm1740, %v1724, 0
    %1744 = vmatprep.subr.mxu0 0.0
    %1745 = vmatpush1.msra.mxu0 %v1725
    %1746 = vmatprep.subr.mxu0 0.0
    %1747 = vmatpush1.msra.mxu0 %v1726
    %1748 = vmatprep.subr.mxu0 0.0
    %1749 = vmatpush1.msra.mxu0 %v1727
    %1750 = vmatprep.subr.mxu0 0.0
    %1751 = vmatpush1.msra.mxu0 %v1728
    %1752 = vmatprep.subr.mxu0 0.0
    %1753 = vmatpush1.msra.mxu0 %v1729
    %1754 = vmatprep.subr.mxu0 0.0
    %1755 = vmatpush1.msra.mxu0 %v1730
    %1756 = vmatprep.subr.mxu0 0.0
    %1757 = vmatpush1.msra.mxu0 %v1731
    %1758 = vmatprep.subr.mxu0 0.0
    %1759 = vmatpush1.msra.mxu0 %v1732
    %1760 = vmatprep.subr.mxu0 0.0
    %1761 = vmatpush1.msra.mxu0 0.0
    %1762 = vmatprep.subr.mxu0 0.0
    %1763 = vmatpush1.msra.mxu0 0.0
    %1764 = vmatprep.subr.mxu0 0.0
    %1765 = vmatpush1.msra.mxu0 0.0
    %1766 = vmatprep.subr.mxu0 0.0
    %1767 = vmatpush1.msra.mxu0 0.0
    %1768 = vmatprep.subr.mxu0 0.0
    %1769 = vmatpush1.msra.mxu0 0.0
    %1770 = vmatprep.subr.mxu0 0.0
    %1771 = vmatpush1.msra.mxu0 0.0
    %1772 = vmatprep.subr.mxu0 0.0
    %1773 = vmatpush1.msra.mxu0 0.0
    %1774 = vmatprep.subr.mxu0 0.0
    %1775 = vmatpush1.msra.mxu0 0.0
    %1776 = vmatprep.subr.mxu0 0.0
    %1777 = vmatpush1.msra.mxu0 0.0
    %1778 = vmatprep.subr.mxu0 0.0
    %1779 = vmatpush1.msra.mxu0 0.0
    %1780 = vmatprep.subr.mxu0 0.0
    %1781 = vmatpush1.msra.mxu0 0.0
    %1782 = vmatprep.subr.mxu0 0.0
    %1783 = vmatpush1.msra.mxu0 0.0
    %1784 = vmatprep.subr.mxu0 0.0
    %1785 = vmatpush1.msra.mxu0 0.0
    %1786 = vmatprep.subr.mxu0 0.0
    %1787 = vmatpush1.msra.mxu0 0.0
    %1788 = vmatprep.subr.mxu0 0.0
    %1789 = vmatpush1.msra.mxu0 0.0
    %1790 = vmatprep.subr.mxu0 0.0
    %1791 = vmatpush1.msra.mxu0 0.0
    %1792 = vmatprep.subr.mxu0 0.0
    %1793 = vmatpush1.msra.mxu0 0.0
    %1794 = vmatprep.subr.mxu0 0.0
    %1795 = vmatpush1.msra.mxu0 0.0
    %1796 = vmatprep.subr.mxu0 0.0
    %1797 = vmatpush1.msra.mxu0 0.0
    %1798 = vmatprep.subr.mxu0 0.0
    %1799 = vmatpush1.msra.mxu0 0.0
    %1800 = vmatprep.subr.mxu0 0.0
    %1801 = vmatpush1.msra.mxu0 0.0
    %1802 = vmatprep.subr.mxu0 0.0
    %1803 = vmatpush1.msra.mxu0 0.0
    %1804 = vmatprep.subr.mxu0 0.0
    %1805 = vmatpush1.msra.mxu0 0.0
    %1806 = vmatprep.subr.mxu0 0.0
    %1807 = vmatpush1.msra.mxu0 0.0
    %1808 = vmatprep.mubr.f32.mxu0 0.0
    %1809 = vmatmul.mubr.f32.gmra.mrb[0].mxu0 %v1742
    %v1810 = vpop.f32.mrb[0].mxu0
    %v1811 = vadd.f32 %v1738, %v1810
    %v1812 = vpop.f32.mrb[0].mxu0
    %1813 = vdwg.mxu0
    %vm1814 = vcmask 1041408
    %v1815 = vsel %vm1814, %v1811, 0.0
    %1816 = vadd.xlane.f32.xlu0 %v1815
    %v1817 = vpop.xlane.xlu0 %1816
    %v1818 = vrot.slane %v1817, 4
    %v1819 = vadd.f32 %v1817, %v1818
    %v1820 = vrot.slane %v1819, 2
    %v1821 = vadd.f32 %v1819, %v1820
    %v1822 = vrot.slane %v1821, 1
    %v1823 = vadd.f32 %v1821, %v1822
    %s1824 = vtos %v1823
    %1826 = vrot.lane.b32.xlu0 %v1811, 112
    %v1827 = vpop.permute.xlu0 %1826
    %vm1829 = vcmask 1024
    %v1830 = vsel %vm1829, %v1827, 0.0
    %1831 = vadd.xlane.f32.xlu0 %v1830
    %v1832 = vpop.xlane.xlu0 %1831
    %v1833 = vrot.slane %v1832, 4
    %v1834 = vadd.f32 %v1832, %v1833
    %v1835 = vrot.slane %v1834, 2
    %v1836 = vadd.f32 %v1834, %v1835
    %v1837 = vrot.slane %v1836, 1
    %v1838 = vadd.f32 %v1836, %v1837
    %s1839 = vtos %v1838
    %s1840 = ssub.f32 %s1824, %s1839
    %s1841 = smul.f32 %s1840, 0.03125
    %v1842 = vstv %s1841
    %v1843 = vsub.f32 %v1811, %v1842
    %1845 = vset.pattern.permute.xlu0 16
    %1846 = vperm.xlu0 %1845, %v1843
    %v1847 = vpop.permute.xlu0 %1846
    %v1849 = vadd.f32 %v1811, %v1847
    %1850 = vst [vmem:[#allocation3] sm:$0x3] %v1849
    // Predicated region
    $region54: #{dueling_dqn_forward.1} parent=1 // pred_check
      _
    $region55: #{dueling_dqn_forward.1} parent=1 // pred_check_branch
      %1852 = sbr.rel (0) target = $region57
    $region56: #{dueling_dqn_forward.1} parent=1 // pred_region
      %s1854 = ssub.s32 32, 32
      %1855 = vsyncadd [#allocation4], %s1854
      %s1857 = sshll.u32 [#allocation3], 4
      %s1858 = int_to_ptr.vmem [resolvable:$true] %s1857
      %1860 = dma.vmem_to_hbm [thread:$0]  %s1858, 32, %s13, [#allocation4]
    $region57: #{dueling_dqn_forward.1} parent=1 // pred_fallthru
      _
    // Predicated region
    $region58: #{dueling_dqn_forward.1} parent=1 // pred_check
      _
    $region59: #{dueling_dqn_forward.1} parent=1 // pred_check_branch
      %1862 = sbr.rel (0) target = $region61
    $region60: #{dueling_dqn_forward.1} parent=1 // pred_region
      %1863 = dma.done [#allocation4], 32
    $region61: #{dueling_dqn_forward.1} parent=1 // pred_fallthru
      _
    %1864 = vsyncpa [#allocation4], 1

</llo_original>
